<compile_context>
chip_gen: v7x
topology: tpu7x:2x2x1
jax: 0.10.0
libtpu: 0.0.40
codegen_flags: <defaults>
</compile_context>

<pallas_src>
import functools

import jax
import jax.numpy as jnp
from jax import lax
from jax.experimental import pallas as pl
from jax.experimental.pallas import tpu as pltpu

IDENT_NT_ID = 3  # stands in for vocabs['nt'].stoi['IdentifierNT']


def _round_up(x, m):
    return (x + m - 1) // m * m


def prod_generator_kernel(h_ref, nt_ref, attn_ref, src_map_ref, w_ref, b_ref,
                          out_ref, *, v, vaug, ident_nt_id):
    rows = h_ref.shape[0]
    bt, slen, cp = src_map_ref.shape
    tlen = rows // bt

    ha = h_ref[...]                                    # (rows, R+NUM_NT) bf16
    nt = nt_ref[...]                                   # (rows, 1) int32

    # One fused MXU pass (bf16 in, f32 accumulate):
    #   columns [0, V)     -> linear(hidden) + mask[nt]   (masked logits)
    #   column  V          -> linear_copy(hidden) logit
    #   columns (V, VAUG)  -> zero padding (masked out of the softmax below)
    aug = jnp.dot(ha, w_ref[...],
                  preferred_element_type=jnp.float32) + b_ref[...]  # (rows, VAUG) f32

    # copy = sigmoid(linear_copy(hidden)); masked_copy = (nt == IdentifierNT) * copy
    copy_logit = aug[:, v:v + 1]                                     # (rows, 1)
    copy = pl.reciprocal(1.0 + jnp.exp(-copy_logit), approx=True)
    is_ident = (nt == ident_nt_id).astype(jnp.float32)
    masked_copy = is_ident * copy                                    # (rows, 1)

    # prob = softmax over the V valid columns (copy-logit + pad columns -> -big)
    lane = lax.broadcasted_iota(jnp.int32, aug.shape, 1)
    logits = jnp.where(lane < v, aug, jnp.float32(-1e30))
    m = jnp.max(logits, axis=1, keepdims=True)
    e = jnp.exp(logits - m)                 # note: bf16 exp is a v6e/v7x-only knob
    prob = e * pl.reciprocal(jnp.sum(e, axis=1, keepdims=True), approx=True)

    # out_prob = prob * (1 - masked_copy)  -> lane-dense, 128-aligned store
    out_ref[:, :vaug] = prob * (1.0 - masked_copy)

    # copy_prob = bmm(attn * masked_copy, src_map)
    mul_attn = (attn_ref[...] * masked_copy).reshape(bt, tlen, slen)
    sm = src_map_ref[...]
    if slen >= 128:
        copy_prob = jnp.einsum('bts,bsc->btc', mul_attn, sm,
                               preferred_element_type=jnp.float32)
    else:
        # tiny contraction: VPU mul-add (MXU would run at ~S/256 efficiency)
        copy_prob = mul_attn[:, :, 0:1] * sm[:, 0:1, :]
        for s in range(1, slen):
            copy_prob = copy_prob + mul_attn[:, :, s:s + 1] * sm[:, s:s + 1, :]
    out_ref[:, vaug:] = copy_prob.reshape(rows, cp)


def prod_generator_forward(hidden, attn, src_map, nt, mask, w, b, wc, bc,
                           ident_nt_id=IDENT_NT_ID, target_rows=512):
    N, R = hidden.shape
    B, S, C = src_map.shape
    T = N // B
    NUM_NT, V = mask.shape

    VAUG = _round_up(V + 1, 128)   # masked logits + copy-logit column, lane-padded
    CP = _round_up(C, 128)         # copy vocab, lane-padded (128-aligned store)

    # --- rows-per-step selection --------------------------------------------
    # rows = bt*T must satisfy the (8,128) sublane constraint; keep >= 2 grid
    # steps when possible (pipeline overlap + v7x's 2nd TensorCore); bound the
    # block by target_rows (shrink on v7x's 64 MiB VMEM for large V, grow on
    # v5e's 128 MiB when sweeping).
    divisors = [d for d in range(1, B + 1) if B % d == 0]
    valid = [d for d in divisors
             if d * T <= max(target_rows, T)
             and (d * T) % 8 == 0
             and (d == 1 or T % 8 == 0)]
    preferred = [d for d in valid if B // d >= 2] or valid or [B]
    bt = max(preferred)
    rows = bt * T
    grid = (B // bt,)

    # --- host-side fusion of linear / linear_copy / mask gather --------------
    onehot = jax.nn.one_hot(nt, NUM_NT, dtype=jnp.bfloat16)             # (N, NUM_NT)
    h_aug = jnp.concatenate([hidden.astype(jnp.bfloat16), onehot], 1)   # (N, R+NUM_NT)
    K = R + NUM_NT

    w_top = (jnp.zeros((R, VAUG), jnp.float32)
             .at[:, :V].set(w)
             .at[:, V].set(wc.reshape(R)))
    w_bot = jnp.zeros((NUM_NT, VAUG), jnp.float32).at[:, :V].set(mask)
    w_aug = jnp.concatenate([w_top, w_bot], 0).astype(jnp.bfloat16)     # (K, VAUG) bf16
    b_aug = (jnp.zeros((1, VAUG), jnp.float32)
             .at[:, :V].set(b)
             .at[0, V].set(bc[0, 0]))                                   # f32 bias

    # pad copy vocab so the right-hand store is full-width (pad cols are zero)
    src_map_p = src_map if CP == C else jnp.pad(src_map,
                                                ((0, 0), (0, 0), (0, CP - C)))
    nt2 = nt.reshape(N, 1).astype(jnp.int32)

    kernel = functools.partial(prod_generator_kernel, v=V, vaug=VAUG,
                               ident_nt_id=ident_nt_id)

    def _call(single_buffer_resident):
        def resident_spec(shape):
            # constant block index -> single-buffer to halve resident VMEM
            if single_buffer_resident:
                return pl.BlockSpec(shape, lambda i: (0,) * len(shape),
                                    pipeline_mode=pl.Buffered(1))
            return pl.BlockSpec(shape, lambda i: (0,) * len(shape))

        return pl.pallas_call(
            kernel,
            out_shape=jax.ShapeDtypeStruct((N, VAUG + CP), jnp.float32),
            grid_spec=pltpu.PrefetchScalarGridSpec(
                num_scalar_prefetch=0,
                grid=grid,
                in_specs=[
                    pl.BlockSpec((rows, K), lambda i: (i, 0)),        # [hidden|onehot(nt)]
                    pl.BlockSpec((rows, 1), lambda i: (i, 0)),        # nt ids
                    pl.BlockSpec((rows, S), lambda i: (i, 0)),        # attn
                    pl.BlockSpec((bt, S, CP), lambda i: (i, 0, 0)),   # src_map (padded)
                    resident_spec((K, VAUG)),                         # fused weight table
                    resident_spec((1, VAUG)),                         # fused bias
                ],
                out_specs=pl.BlockSpec((rows, VAUG + CP), lambda i: (i, 0)),
            ),
            compiler_params=pltpu.CompilerParams(
                dimension_semantics=("parallel",),
                # 48 MiB: safe under v7x's 64 MiB physical VMEM; raise toward
                # 64-100 MiB on v5e/v6e when sweeping target_rows upward.
                vmem_limit_bytes=48 * 1024 * 1024),
        )(h_aug, nt2, attn, src_map_p, w_aug, b_aug)

    try:
        padded = _call(True)
    except Exception:
        # pipeline_mode / pl.Buffered(1) unsupported on this jax build:
        # fall back to default double-buffered resident tables.
        padded = _call(False)

    # strip lane padding: logical scores = cat([out_prob(V), copy_prob(C)], 1)
    return jnp.concatenate([padded[:, :V], padded[:, VAUG:VAUG + C]], axis=1)


if __name__ == "__main__":
    key = jax.random.PRNGKey(0)

    # small synthetic shapes implied by the forward pass
    B, T = 2, 8           # batch, target length  -> N = batch_by_tlen = 16
    R = 32                # rnn_size
    V = 64                # len(vocabs['next_rules'])
    S = 8                 # slen (source length)
    C = 16                # cvocab (extended copy vocab)
    NUM_NT = 8            # len(vocabs['nt'])
    N = B * T

    ks = jax.random.split(key, 9)
    hidden = jax.random.normal(ks[0], (N, R), jnp.float32)
    attn = jax.nn.softmax(jax.random.normal(ks[1], (N, S), jnp.float32), axis=-1)
    src_map = jax.random.uniform(ks[2], (B, S, C), jnp.float32)
    nt = jax.random.randint(ks[3], (N,), 0, NUM_NT)
    # vocabs['mask']: additive logit mask per non-terminal (0 = allowed, -1e4 = blocked)
    mask = jnp.where(jax.random.uniform(ks[4], (NUM_NT, V)) < 0.5,
                     0.0, -1e4).astype(jnp.float32)
    # nn.Linear(rnn_size, V): weight^T (R, V), bias (1, V)
    # nn.Linear(rnn_size, 1): weight    (1, R), bias (1, 1)
    w = (0.02 * jax.random.normal(ks[5], (R, V))).astype(jnp.float32)
    b = (0.02 * jax.random.normal(ks[6], (1, V))).astype(jnp.float32)
    wc = (0.02 * jax.random.normal(ks[7], (1, R))).astype(jnp.float32)
    bc = (0.02 * jax.random.normal(ks[8], (1, 1))).astype(jnp.float32)

    scores = prod_generator_forward(hidden, attn, src_map, nt, mask, w, b, wc, bc)
    jax.block_until_ready(scores)

    # pure-JAX reference check of the forward semantics
    def ref_forward():
        out = hidden @ w + b
        masked_out = out + mask[nt]
        prob = jax.nn.softmax(masked_out, axis=1)
        copy = jax.nn.sigmoid(hidden @ wc.T + bc)
        masked_copy = (nt.reshape(-1, 1) == IDENT_NT_ID).astype(jnp.float32) * copy
        out_prob = prob * (1.0 - masked_copy)
        mul_attn = attn * masked_copy
        copy_prob = jnp.einsum('bts,bsc->btc',
                               mul_attn.reshape(B, T, S), src_map).reshape(-1, C)
        return jnp.concatenate([out_prob, copy_prob], axis=1)

    expected = ref_forward()
    assert scores.shape == (N, V + C)
    # tolerance accounts for bf16 MXU inputs + pl.reciprocal(approx=True)
    assert jnp.allclose(scores, expected, atol=5e-3, rtol=5e-3), (
        float(jnp.max(jnp.abs(scores - expected))))

    print("KERNEL_OK")
</pallas_src>

<mosaic_0001>
module attributes {stable_mosaic.version = 11 : i64} {
  func.func @prod_generator_kernel(%arg0: i32, %arg1: memref<8x40xbf16, #tpu.memory_space<vmem>>, %arg2: memref<8x1xi32, #tpu.memory_space<vmem>>, %arg3: memref<8x8xf32, #tpu.memory_space<vmem>>, %arg4: memref<1x8x128xf32, #tpu.memory_space<vmem>>, %arg5: memref<40x128xbf16, #tpu.memory_space<vmem>>, %arg6: memref<1x128xf32, #tpu.memory_space<vmem>>, %arg7: memref<8x256xf32, #tpu.memory_space<vmem>>) attributes {dimension_semantics = [#tpu.dimension_semantics<parallel>], iteration_bounds = array<i64: 2>, scalar_prefetch = 0 : i64, scratch_operands = 0 : i64, tpu.core_type = #tpu.core_type<tc>, window_params = [{transform_indices = @transform_0, window_bounds = array<i64: 8, 40>}, {transform_indices = @transform_1, window_bounds = array<i64: 8, 1>}, {transform_indices = @transform_2, window_bounds = array<i64: 8, 8>}, {transform_indices = @transform_3, window_bounds = array<i64: 1, 8, 128>}, {pipeline_mode = #tpu.pipeline_mode<synchronous>, transform_indices = @transform_4, window_bounds = array<i64: 40, 128>}, {pipeline_mode = #tpu.pipeline_mode<synchronous>, transform_indices = @transform_5, window_bounds = array<i64: 1, 128>}, {transform_indices = @transform_6, window_bounds = array<i64: 8, 256>}]} {
    %c0 = arith.constant 0 : index
    %c0_0 = arith.constant 0 : index
    %0 = vector.load %arg1[%c0, %c0_0] : memref<8x40xbf16, #tpu.memory_space<vmem>>, vector<8x40xbf16>
    %c0_1 = arith.constant 0 : index
    %c0_2 = arith.constant 0 : index
    %1 = vector.load %arg2[%c0_1, %c0_2] : memref<8x1xi32, #tpu.memory_space<vmem>>, vector<8x1xi32>
    %c0_3 = arith.constant 0 : index
    %c0_4 = arith.constant 0 : index
    %2 = vector.load %arg5[%c0_3, %c0_4] : memref<40x128xbf16, #tpu.memory_space<vmem>>, vector<40x128xbf16>
    %cst = arith.constant dense<0.000000e+00> : vector<8x128xf32>
    %3 = tpu.matmul %0, %2, %cst {dimension_numbers = #tpu.dot_dimension_numbers<[1], [0], [0], [1], [0, 0, 1, 1], [], []>} : vector<8x40xbf16>, vector<40x128xbf16>, vector<8x128xf32> -> vector<8x128xf32>
    %c0_5 = arith.constant 0 : index
    %c0_6 = arith.constant 0 : index
    %4 = vector.load %arg6[%c0_5, %c0_6] : memref<1x128xf32, #tpu.memory_space<vmem>>, vector<1x128xf32>
    %5 = vector.broadcast %4 : vector<1x128xf32> to vector<8x128xf32>
    %6 = arith.addf %3, %5 : vector<8x128xf32>
    %7 = vector.extract_strided_slice %6 {offsets = [0, 64], sizes = [8, 1], strides = [1, 1]} : vector<8x128xf32> to vector<8x1xf32>
    %cst_7 = arith.constant 0.000000e+00 : f32
    %8 = vector.broadcast %cst_7 : f32 to vector<8x1xf32>
    %9 = arith.subf %8, %7 : vector<8x1xf32>
    %10 = math.exp %9 : vector<8x1xf32>
    %cst_8 = arith.constant 1.000000e+00 : f32
    %11 = vector.broadcast %cst_8 : f32 to vector<8x1xf32>
    %12 = arith.addf %11, %10 : vector<8x1xf32>
    %13 = tpu.reciprocal %12 {approx = true} : vector<8x1xf32> -> vector<8x1xf32>
    %c3_i32 = arith.constant 3 : i32
    %14 = vector.broadcast %c3_i32 : i32 to vector<8x1xi32>
    %15 = arith.cmpi eq, %1, %14 : vector<8x1xi32>
    %16 = arith.extui %15 : vector<8x1xi1> to vector<8x1xi32>
    %17 = arith.sitofp %16 : vector<8x1xi32> to vector<8x1xf32>
    %18 = arith.mulf %17, %13 : vector<8x1xf32>
    %19 = tpu.iota {dimensions = array<i32: 1>} : vector<8x128xi32>
    %c64_i32 = arith.constant 64 : i32
    %20 = vector.broadcast %c64_i32 : i32 to vector<8x128xi32>
    %21 = arith.cmpi slt, %19, %20 : vector<8x128xi32>
    %cst_9 = arith.constant -1.000000e+30 : f32
    %22 = vector.broadcast %cst_9 : f32 to vector<8x128xf32>
    %23 = arith.select %21, %6, %22 : vector<8x128xi1>, vector<8x128xf32>
    %cst_10 = arith.constant dense<0xFF800000> : vector<8xf32>
    %24 = vector.multi_reduction <maximumf>, %23, %cst_10 [1] : vector<8x128xf32> to vector<8xf32>
    %25 = vector.shape_cast %24 : vector<8xf32> to vector<8x1xf32>
    %26 = vector.broadcast %25 : vector<8x1xf32> to vector<8x128xf32>
    %27 = arith.subf %23, %26 : vector<8x128xf32>
    %28 = math.exp %27 : vector<8x128xf32>
    %cst_11 = arith.constant dense<0.000000e+00> : vector<8xf32>
    %29 = vector.multi_reduction <add>, %28, %cst_11 [1] : vector<8x128xf32> to vector<8xf32>
    %30 = vector.shape_cast %29 : vector<8xf32> to vector<8x1xf32>
    %31 = tpu.reciprocal %30 {approx = true} : vector<8x1xf32> -> vector<8x1xf32>
    %32 = vector.broadcast %31 : vector<8x1xf32> to vector<8x128xf32>
    %33 = arith.mulf %28, %32 : vector<8x128xf32>
    %cst_12 = arith.constant 1.000000e+00 : f32
    %34 = vector.broadcast %cst_12 : f32 to vector<8x1xf32>
    %35 = arith.subf %34, %18 : vector<8x1xf32>
    %36 = vector.broadcast %35 : vector<8x1xf32> to vector<8x128xf32>
    %37 = arith.mulf %33, %36 : vector<8x128xf32>
    %c0_13 = arith.constant 0 : index
    %c0_14 = arith.constant 0 : index
    %38 = vector.load %arg7[%c0_13, %c0_14] : memref<8x256xf32, #tpu.memory_space<vmem>>, vector<8x128xf32>
    tpu.vector_store %arg7[%c0_13, %c0_14], %37 {strides = array<i32>} : memref<8x256xf32, #tpu.memory_space<vmem>>, vector<8x128xf32>,
    %c0_15 = arith.constant 0 : index
    %c0_16 = arith.constant 0 : index
    %39 = vector.load %arg3[%c0_15, %c0_16] : memref<8x8xf32, #tpu.memory_space<vmem>>, vector<8x8xf32>
    %40 = vector.broadcast %18 : vector<8x1xf32> to vector<8x8xf32>
    %41 = arith.mulf %39, %40 : vector<8x8xf32>
    %42 = vector.shape_cast %41 : vector<8x8xf32> to vector<1x8x8xf32>
    %c0_17 = arith.constant 0 : index
    %c0_18 = arith.constant 0 : index
    %c0_19 = arith.constant 0 : index
    %43 = vector.load %arg4[%c0_17, %c0_18, %c0_19] : memref<1x8x128xf32, #tpu.memory_space<vmem>>, vector<1x8x128xf32>
    %44 = vector.extract_strided_slice %42 {offsets = [0, 0, 0], sizes = [1, 8, 1], strides = [1, 1, 1]} : vector<1x8x8xf32> to vector<1x8x1xf32>
    %45 = vector.extract_strided_slice %43 {offsets = [0, 0, 0], sizes = [1, 1, 128], strides = [1, 1, 1]} : vector<1x8x128xf32> to vector<1x1x128xf32>
    %46 = vector.broadcast %44 : vector<1x8x1xf32> to vector<1x8x128xf32>
    %47 = vector.broadcast %45 : vector<1x1x128xf32> to vector<1x8x128xf32>
    %48 = arith.mulf %46, %47 : vector<1x8x128xf32>
    %49 = vector.extract_strided_slice %42 {offsets = [0, 0, 1], sizes = [1, 8, 1], strides = [1, 1, 1]} : vector<1x8x8xf32> to vector<1x8x1xf32>
    %50 = vector.extract_strided_slice %43 {offsets = [0, 1, 0], sizes = [1, 1, 128], strides = [1, 1, 1]} : vector<1x8x128xf32> to vector<1x1x128xf32>
    %51 = vector.broadcast %49 : vector<1x8x1xf32> to vector<1x8x128xf32>
    %52 = vector.broadcast %50 : vector<1x1x128xf32> to vector<1x8x128xf32>
    %53 = arith.mulf %51, %52 : vector<1x8x128xf32>
    %54 = arith.addf %48, %53 : vector<1x8x128xf32>
    %55 = vector.extract_strided_slice %42 {offsets = [0, 0, 2], sizes = [1, 8, 1], strides = [1, 1, 1]} : vector<1x8x8xf32> to vector<1x8x1xf32>
    %56 = vector.extract_strided_slice %43 {offsets = [0, 2, 0], sizes = [1, 1, 128], strides = [1, 1, 1]} : vector<1x8x128xf32> to vector<1x1x128xf32>
    %57 = vector.broadcast %55 : vector<1x8x1xf32> to vector<1x8x128xf32>
    %58 = vector.broadcast %56 : vector<1x1x128xf32> to vector<1x8x128xf32>
    %59 = arith.mulf %57, %58 : vector<1x8x128xf32>
    %60 = arith.addf %54, %59 : vector<1x8x128xf32>
    %61 = vector.extract_strided_slice %42 {offsets = [0, 0, 3], sizes = [1, 8, 1], strides = [1, 1, 1]} : vector<1x8x8xf32> to vector<1x8x1xf32>
    %62 = vector.extract_strided_slice %43 {offsets = [0, 3, 0], sizes = [1, 1, 128], strides = [1, 1, 1]} : vector<1x8x128xf32> to vector<1x1x128xf32>
    %63 = vector.broadcast %61 : vector<1x8x1xf32> to vector<1x8x128xf32>
    %64 = vector.broadcast %62 : vector<1x1x128xf32> to vector<1x8x128xf32>
    %65 = arith.mulf %63, %64 : vector<1x8x128xf32>
    %66 = arith.addf %60, %65 : vector<1x8x128xf32>
    %67 = vector.extract_strided_slice %42 {offsets = [0, 0, 4], sizes = [1, 8, 1], strides = [1, 1, 1]} : vector<1x8x8xf32> to vector<1x8x1xf32>
    %68 = vector.extract_strided_slice %43 {offsets = [0, 4, 0], sizes = [1, 1, 128], strides = [1, 1, 1]} : vector<1x8x128xf32> to vector<1x1x128xf32>
    %69 = vector.broadcast %67 : vector<1x8x1xf32> to vector<1x8x128xf32>
    %70 = vector.broadcast %68 : vector<1x1x128xf32> to vector<1x8x128xf32>
    %71 = arith.mulf %69, %70 : vector<1x8x128xf32>
    %72 = arith.addf %66, %71 : vector<1x8x128xf32>
    %73 = vector.extract_strided_slice %42 {offsets = [0, 0, 5], sizes = [1, 8, 1], strides = [1, 1, 1]} : vector<1x8x8xf32> to vector<1x8x1xf32>
    %74 = vector.extract_strided_slice %43 {offsets = [0, 5, 0], sizes = [1, 1, 128], strides = [1, 1, 1]} : vector<1x8x128xf32> to vector<1x1x128xf32>
    %75 = vector.broadcast %73 : vector<1x8x1xf32> to vector<1x8x128xf32>
    %76 = vector.broadcast %74 : vector<1x1x128xf32> to vector<1x8x128xf32>
    %77 = arith.mulf %75, %76 : vector<1x8x128xf32>
    %78 = arith.addf %72, %77 : vector<1x8x128xf32>
    %79 = vector.extract_strided_slice %42 {offsets = [0, 0, 6], sizes = [1, 8, 1], strides = [1, 1, 1]} : vector<1x8x8xf32> to vector<1x8x1xf32>
    %80 = vector.extract_strided_slice %43 {offsets = [0, 6, 0], sizes = [1, 1, 128], strides = [1, 1, 1]} : vector<1x8x128xf32> to vector<1x1x128xf32>
    %81 = vector.broadcast %79 : vector<1x8x1xf32> to vector<1x8x128xf32>
    %82 = vector.broadcast %80 : vector<1x1x128xf32> to vector<1x8x128xf32>
    %83 = arith.mulf %81, %82 : vector<1x8x128xf32>
    %84 = arith.addf %78, %83 : vector<1x8x128xf32>
    %85 = vector.extract_strided_slice %42 {offsets = [0, 0, 7], sizes = [1, 8, 1], strides = [1, 1, 1]} : vector<1x8x8xf32> to vector<1x8x1xf32>
    %86 = vector.extract_strided_slice %43 {offsets = [0, 7, 0], sizes = [1, 1, 128], strides = [1, 1, 1]} : vector<1x8x128xf32> to vector<1x1x128xf32>
    %87 = vector.broadcast %85 : vector<1x8x1xf32> to vector<1x8x128xf32>
    %88 = vector.broadcast %86 : vector<1x1x128xf32> to vector<1x8x128xf32>
    %89 = arith.mulf %87, %88 : vector<1x8x128xf32>
    %90 = arith.addf %84, %89 : vector<1x8x128xf32>
    %91 = vector.shape_cast %90 : vector<1x8x128xf32> to vector<8x128xf32>
    %c0_20 = arith.constant 0 : index
    %c128 = arith.constant 128 : index
    %92 = vector.load %arg7[%c0_20, %c128] : memref<8x256xf32, #tpu.memory_space<vmem>>, vector<8x128xf32>
    tpu.vector_store %arg7[%c0_20, %c128], %91 {strides = array<i32>} : memref<8x256xf32, #tpu.memory_space<vmem>>, vector<8x128xf32>,
    return
  }
  func.func @transform_0(%arg0: i32) -> (i32, i32) {
    %c0_i32 = arith.constant 0 : i32
    %c0_i32_0 = arith.constant 0 : i32
    return %arg0, %c0_i32 : i32, i32
  }
  func.func @transform_1(%arg0: i32) -> (i32, i32) {
    %c0_i32 = arith.constant 0 : i32
    %c0_i32_0 = arith.constant 0 : i32
    return %arg0, %c0_i32 : i32, i32
  }
  func.func @transform_2(%arg0: i32) -> (i32, i32) {
    %c0_i32 = arith.constant 0 : i32
    %c0_i32_0 = arith.constant 0 : i32
    return %arg0, %c0_i32 : i32, i32
  }
  func.func @transform_3(%arg0: i32) -> (i32, i32, i32) {
    %c0_i32 = arith.constant 0 : i32
    %c0_i32_0 = arith.constant 0 : i32
    %c0_i32_1 = arith.constant 0 : i32
    return %arg0, %c0_i32, %c0_i32_0 : i32, i32, i32
  }
  func.func @transform_4(%arg0: i32) -> (i32, i32) {
    %c0_i32 = arith.constant 0 : i32
    %c0_i32_0 = arith.constant 0 : i32
    %c0_i32_1 = arith.constant 0 : i32
    return %c0_i32, %c0_i32_0 : i32, i32
  }
  func.func @transform_5(%arg0: i32) -> (i32, i32) {
    %c0_i32 = arith.constant 0 : i32
    %c0_i32_0 = arith.constant 0 : i32
    %c0_i32_1 = arith.constant 0 : i32
    return %c0_i32, %c0_i32_0 : i32, i32
  }
  func.func @transform_6(%arg0: i32) -> (i32, i32) {
    %c0_i32 = arith.constant 0 : i32
    %c0_i32_0 = arith.constant 0 : i32
    return %arg0, %c0_i32 : i32, i32
  }
}

module attributes {stable_mosaic.version = 11 : i64} {
  func.func @prod_generator_kernel(%arg0: i32, %arg1: memref<8x40xbf16, #tpu.memory_space<vmem>>, %arg2: memref<8x1xi32, #tpu.memory_space<vmem>>, %arg3: memref<8x8xf32, #tpu.memory_space<vmem>>, %arg4: memref<1x8x128xf32, #tpu.memory_space<vmem>>, %arg5: memref<40x128xbf16, #tpu.memory_space<vmem>>, %arg6: memref<1x128xf32, #tpu.memory_space<vmem>>, %arg7: memref<8x256xf32, #tpu.memory_space<vmem>>) attributes {dimension_semantics = [#tpu.dimension_semantics<parallel>], iteration_bounds = array<i64: 2>, scalar_prefetch = 0 : i64, scratch_operands = 0 : i64, tpu.core_type = #tpu.core_type<tc>, window_params = [{transform_indices = @transform_0, window_bounds = array<i64: 8, 40>}, {transform_indices = @transform_1, window_bounds = array<i64: 8, 1>}, {transform_indices = @transform_2, window_bounds = array<i64: 8, 8>}, {transform_indices = @transform_3, window_bounds = array<i64: 1, 8, 128>}, {pipeline_mode = #tpu.pipeline_mode<synchronous>, transform_indices = @transform_4, window_bounds = array<i64: 40, 128>}, {pipeline_mode = #tpu.pipeline_mode<synchronous>, transform_indices = @transform_5, window_bounds = array<i64: 1, 128>}, {transform_indices = @transform_6, window_bounds = array<i64: 8, 256>}]} {
    %c0 = arith.constant 0 : index
    %c0_0 = arith.constant 0 : index
    %0 = vector.load %arg1[%c0, %c0_0] : memref<8x40xbf16, #tpu.memory_space<vmem>>, vector<8x40xbf16>
    %c0_1 = arith.constant 0 : index
    %c0_2 = arith.constant 0 : index
    %1 = vector.load %arg2[%c0_1, %c0_2] : memref<8x1xi32, #tpu.memory_space<vmem>>, vector<8x1xi32>
    %c0_3 = arith.constant 0 : index
    %c0_4 = arith.constant 0 : index
    %2 = vector.load %arg5[%c0_3, %c0_4] : memref<40x128xbf16, #tpu.memory_space<vmem>>, vector<40x128xbf16>
    %cst = arith.constant dense<0.000000e+00> : vector<8x128xf32>
    %3 = tpu.matmul %0, %2, %cst {dimension_numbers = #tpu.dot_dimension_numbers<[1], [0], [0], [1], [0, 0, 1, 1], [], []>} : vector<8x40xbf16>, vector<40x128xbf16>, vector<8x128xf32> -> vector<8x128xf32>
    %c0_5 = arith.constant 0 : index
    %c0_6 = arith.constant 0 : index
    %4 = vector.load %arg6[%c0_5, %c0_6] : memref<1x128xf32, #tpu.memory_space<vmem>>, vector<1x128xf32>
    %5 = vector.broadcast %4 : vector<1x128xf32> to vector<8x128xf32>
    %6 = arith.addf %3, %5 : vector<8x128xf32>
    %7 = vector.extract_strided_slice %6 {offsets = [0, 64], sizes = [8, 1], strides = [1, 1]} : vector<8x128xf32> to vector<8x1xf32>
    %cst_7 = arith.constant 0.000000e+00 : f32
    %8 = vector.broadcast %cst_7 : f32 to vector<8x1xf32>
    %9 = arith.subf %8, %7 : vector<8x1xf32>
    %10 = math.exp %9 : vector<8x1xf32>
    %cst_8 = arith.constant 1.000000e+00 : f32
    %11 = vector.broadcast %cst_8 : f32 to vector<8x1xf32>
    %12 = arith.addf %11, %10 : vector<8x1xf32>
    %13 = tpu.reciprocal %12 {approx = true} : vector<8x1xf32> -> vector<8x1xf32>
    %c3_i32 = arith.constant 3 : i32
    %14 = vector.broadcast %c3_i32 : i32 to vector<8x1xi32>
    %15 = arith.cmpi eq, %1, %14 : vector<8x1xi32>
    %16 = arith.extui %15 : vector<8x1xi1> to vector<8x1xi32>
    %17 = arith.sitofp %16 : vector<8x1xi32> to vector<8x1xf32>
    %18 = arith.mulf %17, %13 : vector<8x1xf32>
    %19 = tpu.iota {dimensions = array<i32: 1>} : vector<8x128xi32>
    %c64_i32 = arith.constant 64 : i32
    %20 = vector.broadcast %c64_i32 : i32 to vector<8x128xi32>
    %21 = arith.cmpi slt, %19, %20 : vector<8x128xi32>
    %cst_9 = arith.constant -1.000000e+30 : f32
    %22 = vector.broadcast %cst_9 : f32 to vector<8x128xf32>
    %23 = arith.select %21, %6, %22 : vector<8x128xi1>, vector<8x128xf32>
    %cst_10 = arith.constant dense<0xFF800000> : vector<8xf32>
    %24 = vector.multi_reduction <maximumf>, %23, %cst_10 [1] : vector<8x128xf32> to vector<8xf32>
    %25 = vector.shape_cast %24 : vector<8xf32> to vector<8x1xf32>
    %26 = vector.broadcast %25 : vector<8x1xf32> to vector<8x128xf32>
    %27 = arith.subf %23, %26 : vector<8x128xf32>
    %28 = math.exp %27 : vector<8x128xf32>
    %cst_11 = arith.constant dense<0.000000e+00> : vector<8xf32>
    %29 = vector.multi_reduction <add>, %28, %cst_11 [1] : vector<8x128xf32> to vector<8xf32>
    %30 = vector.shape_cast %29 : vector<8xf32> to vector<8x1xf32>
    %31 = tpu.reciprocal %30 {approx = true} : vector<8x1xf32> -> vector<8x1xf32>
    %32 = vector.broadcast %31 : vector<8x1xf32> to vector<8x128xf32>
    %33 = arith.mulf %28, %32 : vector<8x128xf32>
    %cst_12 = arith.constant 1.000000e+00 : f32
    %34 = vector.broadcast %cst_12 : f32 to vector<8x1xf32>
    %35 = arith.subf %34, %18 : vector<8x1xf32>
    %36 = vector.broadcast %35 : vector<8x1xf32> to vector<8x128xf32>
    %37 = arith.mulf %33, %36 : vector<8x128xf32>
    %c0_13 = arith.constant 0 : index
    %c0_14 = arith.constant 0 : index
    %38 = vector.load %arg7[%c0_13, %c0_14] : memref<8x256xf32, #tpu.memory_space<vmem>>, vector<8x128xf32>
    tpu.vector_store %arg7[%c0_13, %c0_14], %37 {strides = array<i32>} : memref<8x256xf32, #tpu.memory_space<vmem>>, vector<8x128xf32>,
    %c0_15 = arith.constant 0 : index
    %c0_16 = arith.constant 0 : index
    %39 = vector.load %arg3[%c0_15, %c0_16] : memref<8x8xf32, #tpu.memory_space<vmem>>, vector<8x8xf32>
    %40 = vector.broadcast %18 : vector<8x1xf32> to vector<8x8xf32>
    %41 = arith.mulf %39, %40 : vector<8x8xf32>
    %42 = vector.shape_cast %41 : vector<8x8xf32> to vector<1x8x8xf32>
    %c0_17 = arith.constant 0 : index
    %c0_18 = arith.constant 0 : index
    %c0_19 = arith.constant 0 : index
    %43 = vector.load %arg4[%c0_17, %c0_18, %c0_19] : memref<1x8x128xf32, #tpu.memory_space<vmem>>, vector<1x8x128xf32>
    %44 = vector.extract_strided_slice %42 {offsets = [0, 0, 0], sizes = [1, 8, 1], strides = [1, 1, 1]} : vector<1x8x8xf32> to vector<1x8x1xf32>
    %45 = vector.extract_strided_slice %43 {offsets = [0, 0, 0], sizes = [1, 1, 128], strides = [1, 1, 1]} : vector<1x8x128xf32> to vector<1x1x128xf32>
    %46 = vector.broadcast %44 : vector<1x8x1xf32> to vector<1x8x128xf32>
    %47 = vector.broadcast %45 : vector<1x1x128xf32> to vector<1x8x128xf32>
    %48 = arith.mulf %46, %47 : vector<1x8x128xf32>
    %49 = vector.extract_strided_slice %42 {offsets = [0, 0, 1], sizes = [1, 8, 1], strides = [1, 1, 1]} : vector<1x8x8xf32> to vector<1x8x1xf32>
    %50 = vector.extract_strided_slice %43 {offsets = [0, 1, 0], sizes = [1, 1, 128], strides = [1, 1, 1]} : vector<1x8x128xf32> to vector<1x1x128xf32>
    %51 = vector.broadcast %49 : vector<1x8x1xf32> to vector<1x8x128xf32>
    %52 = vector.broadcast %50 : vector<1x1x128xf32> to vector<1x8x128xf32>
    %53 = arith.mulf %51, %52 : vector<1x8x128xf32>
    %54 = arith.addf %48, %53 : vector<1x8x128xf32>
    %55 = vector.extract_strided_slice %42 {offsets = [0, 0, 2], sizes = [1, 8, 1], strides = [1, 1, 1]} : vector<1x8x8xf32> to vector<1x8x1xf32>
    %56 = vector.extract_strided_slice %43 {offsets = [0, 2, 0], sizes = [1, 1, 128], strides = [1, 1, 1]} : vector<1x8x128xf32> to vector<1x1x128xf32>
    %57 = vector.broadcast %55 : vector<1x8x1xf32> to vector<1x8x128xf32>
    %58 = vector.broadcast %56 : vector<1x1x128xf32> to vector<1x8x128xf32>
    %59 = arith.mulf %57, %58 : vector<1x8x128xf32>
    %60 = arith.addf %54, %59 : vector<1x8x128xf32>
    %61 = vector.extract_strided_slice %42 {offsets = [0, 0, 3], sizes = [1, 8, 1], strides = [1, 1, 1]} : vector<1x8x8xf32> to vector<1x8x1xf32>
    %62 = vector.extract_strided_slice %43 {offsets = [0, 3, 0], sizes = [1, 1, 128], strides = [1, 1, 1]} : vector<1x8x128xf32> to vector<1x1x128xf32>
    %63 = vector.broadcast %61 : vector<1x8x1xf32> to vector<1x8x128xf32>
    %64 = vector.broadcast %62 : vector<1x1x128xf32> to vector<1x8x128xf32>
    %65 = arith.mulf %63, %64 : vector<1x8x128xf32>
    %66 = arith.addf %60, %65 : vector<1x8x128xf32>
    %67 = vector.extract_strided_slice %42 {offsets = [0, 0, 4], sizes = [1, 8, 1], strides = [1, 1, 1]} : vector<1x8x8xf32> to vector<1x8x1xf32>
    %68 = vector.extract_strided_slice %43 {offsets = [0, 4, 0], sizes = [1, 1, 128], strides = [1, 1, 1]} : vector<1x8x128xf32> to vector<1x1x128xf32>
    %69 = vector.broadcast %67 : vector<1x8x1xf32> to vector<1x8x128xf32>
    %70 = vector.broadcast %68 : vector<1x1x128xf32> to vector<1x8x128xf32>
    %71 = arith.mulf %69, %70 : vector<1x8x128xf32>
    %72 = arith.addf %66, %71 : vector<1x8x128xf32>
    %73 = vector.extract_strided_slice %42 {offsets = [0, 0, 5], sizes = [1, 8, 1], strides = [1, 1, 1]} : vector<1x8x8xf32> to vector<1x8x1xf32>
    %74 = vector.extract_strided_slice %43 {offsets = [0, 5, 0], sizes = [1, 1, 128], strides = [1, 1, 1]} : vector<1x8x128xf32> to vector<1x1x128xf32>
    %75 = vector.broadcast %73 : vector<1x8x1xf32> to vector<1x8x128xf32>
    %76 = vector.broadcast %74 : vector<1x1x128xf32> to vector<1x8x128xf32>
    %77 = arith.mulf %75, %76 : vector<1x8x128xf32>
    %78 = arith.addf %72, %77 : vector<1x8x128xf32>
    %79 = vector.extract_strided_slice %42 {offsets = [0, 0, 6], sizes = [1, 8, 1], strides = [1, 1, 1]} : vector<1x8x8xf32> to vector<1x8x1xf32>
    %80 = vector.extract_strided_slice %43 {offsets = [0, 6, 0], sizes = [1, 1, 128], strides = [1, 1, 1]} : vector<1x8x128xf32> to vector<1x1x128xf32>
    %81 = vector.broadcast %79 : vector<1x8x1xf32> to vector<1x8x128xf32>
    %82 = vector.broadcast %80 : vector<1x1x128xf32> to vector<1x8x128xf32>
    %83 = arith.mulf %81, %82 : vector<1x8x128xf32>
    %84 = arith.addf %78, %83 : vector<1x8x128xf32>
    %85 = vector.extract_strided_slice %42 {offsets = [0, 0, 7], sizes = [1, 8, 1], strides = [1, 1, 1]} : vector<1x8x8xf32> to vector<1x8x1xf32>
    %86 = vector.extract_strided_slice %43 {offsets = [0, 7, 0], sizes = [1, 1, 128], strides = [1, 1, 1]} : vector<1x8x128xf32> to vector<1x1x128xf32>
    %87 = vector.broadcast %85 : vector<1x8x1xf32> to vector<1x8x128xf32>
    %88 = vector.broadcast %86 : vector<1x1x128xf32> to vector<1x8x128xf32>
    %89 = arith.mulf %87, %88 : vector<1x8x128xf32>
    %90 = arith.addf %84, %89 : vector<1x8x128xf32>
    %91 = vector.shape_cast %90 : vector<1x8x128xf32> to vector<8x128xf32>
    %c0_20 = arith.constant 0 : index
    %c128 = arith.constant 128 : index
    %92 = vector.load %arg7[%c0_20, %c128] : memref<8x256xf32, #tpu.memory_space<vmem>>, vector<8x128xf32>
    tpu.vector_store %arg7[%c0_20, %c128], %91 {strides = array<i32>} : memref<8x256xf32, #tpu.memory_space<vmem>>, vector<8x128xf32>,
    return
  }
  func.func @transform_0(%arg0: i32) -> (i32, i32) {
    %c0_i32 = arith.constant 0 : i32
    %c0_i32_0 = arith.constant 0 : i32
    return %arg0, %c0_i32 : i32, i32
  }
  func.func @transform_1(%arg0: i32) -> (i32, i32) {
    %c0_i32 = arith.constant 0 : i32
    %c0_i32_0 = arith.constant 0 : i32
    return %arg0, %c0_i32 : i32, i32
  }
  func.func @transform_2(%arg0: i32) -> (i32, i32) {
    %c0_i32 = arith.constant 0 : i32
    %c0_i32_0 = arith.constant 0 : i32
    return %arg0, %c0_i32 : i32, i32
  }
  func.func @transform_3(%arg0: i32) -> (i32, i32, i32) {
    %c0_i32 = arith.constant 0 : i32
    %c0_i32_0 = arith.constant 0 : i32
    %c0_i32_1 = arith.constant 0 : i32
    return %arg0, %c0_i32, %c0_i32_0 : i32, i32, i32
  }
  func.func @transform_4(%arg0: i32) -> (i32, i32) {
    %c0_i32 = arith.constant 0 : i32
    %c0_i32_0 = arith.constant 0 : i32
    %c0_i32_1 = arith.constant 0 : i32
    return %c0_i32, %c0_i32_0 : i32, i32
  }
  func.func @transform_5(%arg0: i32) -> (i32, i32) {
    %c0_i32 = arith.constant 0 : i32
    %c0_i32_0 = arith.constant 0 : i32
    %c0_i32_1 = arith.constant 0 : i32
    return %c0_i32, %c0_i32_0 : i32, i32
  }
  func.func @transform_6(%arg0: i32) -> (i32, i32) {
    %c0_i32 = arith.constant 0 : i32
    %c0_i32_0 = arith.constant 0 : i32
    return %arg0, %c0_i32 : i32, i32
  }
}

</mosaic_0001>

<llo_original>
// kernel: tpu_custom_call.1
$region0: #{tpu_custom_call.1}
  #allocation0 [shape = 'u32[]', space=smem, size = 0x4, offset = 0x4, fixed_abs, tag = 'smem constant byte address 0x4 - core index']
  #allocation1 [shape = 'u32[144,128]{1,0:T(1,128)}', space=vmem, size = 0x12000, scoped, tag = 'internal scratch']
  %s0 = inlined_call_operand.hbm [shape: bf16[16,40], index: 0, kind: input, shape index: {}]
  %s1 = inlined_call_operand.vmem [shape: s32[16,1], index: 1, kind: input, shape index: {}]
  %s2 = inlined_call_operand.vmem [shape: f32[16,8], index: 2, kind: input, shape index: {}]
  %s3 = inlined_call_operand.vmem [shape: f32[2,8,128], index: 3, kind: input, shape index: {}]
  %s4 = inlined_call_operand.vmem [shape: bf16[40,128], index: 4, kind: input, shape index: {}]
  %s5 = inlined_call_operand.vmem [shape: f32[1,128], index: 5, kind: input, shape index: {}]
  %s6 = inlined_call_operand.hbm [shape: f32[16,256], index: 6, kind: output, shape index: {}]
  %s7 = sld [smem:[#allocation0]]
  $region61: #{tpu_custom_call.1} parent=0
    _
  %s9 = ssub.s32 1, %s7
  %s10 = scalar_select 0, %s9, %s7
  $region1: #{tpu_custom_call.1} parent=0
    #allocation2 [shape = 'u8[4096]{0}', space=vmem, size = 0x1000, scoped, tag = 'input window, operand 0']
    #allocation3 [shape = 's32[2]{0}', space=sflag, size = 0x8, scoped, tag = 'scoped memory for tpu_custom_call.1']
    #allocation4 [shape = 's32[2]{0}', space=sflag, size = 0x8, scoped, tag = 'scoped memory for tpu_custom_call.1']
    #allocation5 [shape = 'u8[16384]{0}', space=vmem, size = 0x4000, scoped, tag = 'output window, operand 0']
    %11 = vsyncpa [#allocation3], 0
    %s12 = scalar_lea.sflag [#allocation3], 1
    %13 = vsyncpa %s12, 0
    %14 = vsyncpa [#allocation4], 0
    %s15 = scalar_lea.sflag [#allocation4], 1
    %16 = vsyncpa %s15, 0
    loop: start=0, step=1, limit=4
    $region2: #{tpu_custom_call.1} parent=1 // loop_pre_header
      _
    $region3: #{tpu_custom_call.1} parent=1 // loop_header
      %s18 = sphi 0, %s22
      %p19 = scmp.ge.s32.totalorder %s18, 4
      %s28 = sphi 0, %s30
      %s31 = sphi 0, %s28
      %s32 = sphi 0, %s31
      %s48 = sphi 0, %s32
      %s54 = sphi 0, %s56
      %s57 = sphi 0, %s54
      %s58 = sphi 0, %s57
      %s74 = sphi 0, %s58
      %s80 = sphi 0, %s82
      %s83 = sphi 0, %s80
      %s84 = sphi 0, %s83
      %s100 = sphi 0, %s84
      %s106 = sphi 0, %s108
      %s109 = sphi 0, %s106
      %s110 = sphi 0, %s109
      %s126 = sphi 0, %s110
      %s130 = sphi 0, %s130
      %s132 = sphi 0, %s130
      %s133 = sphi 0, %s132
      %s147 = sphi 0, %s133
      %s151 = sphi 0, %s151
      %s153 = sphi 0, %s151
      %s154 = sphi 0, %s153
      %s168 = sphi 0, %s154
      %s174 = sphi 0, %s176
      %s177 = sphi 0, %s174
      %s178 = sphi 0, %s177
      %s194 = sphi 0, %s178
    $region4: #{tpu_custom_call.1} parent=1 // loop_header_branch
      %21 = sbr.rel (%p19) target = $region8
    $region5: #{tpu_custom_call.1} parent=1 // loop_body
      %s23 = ssub.s32 %s18, 1
      %s24 = ssub.s32 %s18, 2
      %s25 = sadd.s32 %s18, 1
      %s26 = ssub.s32 %s18, %s25
      %p27 = scmp.eq.s32.totalorder %s26, 0
      %s29 = sadd.s32 %s28, 1
      %s30 = scalar_select %p27, %s28, %s29
      %p33 = pneg %p27
      %p34 = scmp.eq.s32.totalorder %s18, 1
      %p35 = por %p33, %p34
      %p36 = scmp.ne.s32.totalorder %s28, %s31
      %p37 = scmp.eq.s32.totalorder %s18, 0
      %p38 = por %p36, %p37
      %p39 = scmp.ne.s32.totalorder %s28, %s31
      %p40 = scmp.eq.s32.totalorder %s23, 1
      %p41 = por %p39, %p40
      %p42 = scmp.ne.s32.totalorder %s31, %s32
      %p43 = scmp.eq.s32.totalorder %s23, 0
      %p44 = por %p42, %p43
      %p45 = scmp.ne.s32.totalorder %s31, %s32
      %p46 = scmp.eq.s32.totalorder %s24, 1
      %p47 = por %p45, %p46
      %p49 = scmp.ne.s32.totalorder %s32, %s48
      %p50 = scmp.eq.s32.totalorder %s24, 0
      %p51 = por %p49, %p50
      %s52 = ssub.s32 %s18, %s25
      %p53 = scmp.eq.s32.totalorder %s52, 0
      %s55 = sadd.s32 %s54, 1
      %s56 = scalar_select %p53, %s54, %s55
      %p59 = pneg %p53
      %p60 = scmp.eq.s32.totalorder %s18, 1
      %p61 = por %p59, %p60
      %p62 = scmp.ne.s32.totalorder %s54, %s57
      %p63 = scmp.eq.s32.totalorder %s18, 0
      %p64 = por %p62, %p63
      %p65 = scmp.ne.s32.totalorder %s54, %s57
      %p66 = scmp.eq.s32.totalorder %s23, 1
      %p67 = por %p65, %p66
      %p68 = scmp.ne.s32.totalorder %s57, %s58
      %p69 = scmp.eq.s32.totalorder %s23, 0
      %p70 = por %p68, %p69
      %p71 = scmp.ne.s32.totalorder %s57, %s58
      %p72 = scmp.eq.s32.totalorder %s24, 1
      %p73 = por %p71, %p72
      %p75 = scmp.ne.s32.totalorder %s58, %s74
      %p76 = scmp.eq.s32.totalorder %s24, 0
      %p77 = por %p75, %p76
      %s78 = ssub.s32 %s18, %s25
      %p79 = scmp.eq.s32.totalorder %s78, 0
      %s81 = sadd.s32 %s80, 1
      %s82 = scalar_select %p79, %s80, %s81
      %p85 = pneg %p79
      %p86 = scmp.eq.s32.totalorder %s18, 1
      %p87 = por %p85, %p86
      %p88 = scmp.ne.s32.totalorder %s80, %s83
      %p89 = scmp.eq.s32.totalorder %s18, 0
      %p90 = por %p88, %p89
      %p91 = scmp.ne.s32.totalorder %s80, %s83
      %p92 = scmp.eq.s32.totalorder %s23, 1
      %p93 = por %p91, %p92
      %p94 = scmp.ne.s32.totalorder %s83, %s84
      %p95 = scmp.eq.s32.totalorder %s23, 0
      %p96 = por %p94, %p95
      %p97 = scmp.ne.s32.totalorder %s83, %s84
      %p98 = scmp.eq.s32.totalorder %s24, 1
      %p99 = por %p97, %p98
      %p101 = scmp.ne.s32.totalorder %s84, %s100
      %p102 = scmp.eq.s32.totalorder %s24, 0
      %p103 = por %p101, %p102
      %s104 = ssub.s32 %s18, %s25
      %p105 = scmp.eq.s32.totalorder %s104, 0
      %s107 = sadd.s32 %s106, 1
      %s108 = scalar_select %p105, %s106, %s107
      %p111 = pneg %p105
      %p112 = scmp.eq.s32.totalorder %s18, 1
      %p113 = por %p111, %p112
      %p114 = scmp.ne.s32.totalorder %s106, %s109
      %p115 = scmp.eq.s32.totalorder %s18, 0
      %p116 = por %p114, %p115
      %p117 = scmp.ne.s32.totalorder %s106, %s109
      %p118 = scmp.eq.s32.totalorder %s23, 1
      %p119 = por %p117, %p118
      %p120 = scmp.ne.s32.totalorder %s109, %s110
      %p121 = scmp.eq.s32.totalorder %s23, 0
      %p122 = por %p120, %p121
      %p123 = scmp.ne.s32.totalorder %s109, %s110
      %p124 = scmp.eq.s32.totalorder %s24, 1
      %p125 = por %p123, %p124
      %p127 = scmp.ne.s32.totalorder %s110, %s126
      %p128 = scmp.eq.s32.totalorder %s24, 0
      %p129 = por %p127, %p128
      %s131 = sadd.s32 %s130, 1
      %p134 = scmp.eq.s32.totalorder %s18, 1
      %p135 = scmp.ne.s32.totalorder %s130, %s132
      %p136 = scmp.eq.s32.totalorder %s18, 0
      %p137 = por %p135, %p136
      %p138 = scmp.ne.s32.totalorder %s130, %s132
      %p139 = scmp.eq.s32.totalorder %s23, 1
      %p140 = por %p138, %p139
      %p141 = scmp.ne.s32.totalorder %s132, %s133
      %p142 = scmp.eq.s32.totalorder %s23, 0
      %p143 = por %p141, %p142
      %p144 = scmp.ne.s32.totalorder %s132, %s133
      %p145 = scmp.eq.s32.totalorder %s24, 1
      %p146 = por %p144, %p145
      %p148 = scmp.ne.s32.totalorder %s133, %s147
      %p149 = scmp.eq.s32.totalorder %s24, 0
      %p150 = por %p148, %p149
      %s152 = sadd.s32 %s151, 1
      %p155 = scmp.eq.s32.totalorder %s18, 1
      %p156 = scmp.ne.s32.totalorder %s151, %s153
      %p157 = scmp.eq.s32.totalorder %s18, 0
      %p158 = por %p156, %p157
      %p159 = scmp.ne.s32.totalorder %s151, %s153
      %p160 = scmp.eq.s32.totalorder %s23, 1
      %p161 = por %p159, %p160
      %p162 = scmp.ne.s32.totalorder %s153, %s154
      %p163 = scmp.eq.s32.totalorder %s23, 0
      %p164 = por %p162, %p163
      %p165 = scmp.ne.s32.totalorder %s153, %s154
      %p166 = scmp.eq.s32.totalorder %s24, 1
      %p167 = por %p165, %p166
      %p169 = scmp.ne.s32.totalorder %s154, %s168
      %p170 = scmp.eq.s32.totalorder %s24, 0
      %p171 = por %p169, %p170
      %s172 = ssub.s32 %s18, %s25
      %p173 = scmp.eq.s32.totalorder %s172, 0
      %s175 = sadd.s32 %s174, 1
      %s176 = scalar_select %p173, %s174, %s175
      %p179 = pneg %p173
      %p180 = scmp.eq.s32.totalorder %s18, 1
      %p181 = por %p179, %p180
      %p182 = scmp.ne.s32.totalorder %s174, %s177
      %p183 = scmp.eq.s32.totalorder %s18, 0
      %p184 = por %p182, %p183
      %p185 = scmp.ne.s32.totalorder %s174, %s177
      %p186 = scmp.eq.s32.totalorder %s23, 1
      %p187 = por %p185, %p186
      %p188 = scmp.ne.s32.totalorder %s177, %s178
      %p189 = scmp.eq.s32.totalorder %s23, 0
      %p190 = por %p188, %p189
      %p191 = scmp.ne.s32.totalorder %s177, %s178
      %p192 = scmp.eq.s32.totalorder %s24, 1
      %p193 = por %p191, %p192
      %p195 = scmp.ne.s32.totalorder %s178, %s194
      %p196 = scmp.eq.s32.totalorder %s24, 0
      %p197 = por %p195, %p196
      %p198 = scmp.le.s32.totalorder 1, %s18
      %p199 = scmp.lt.s32.totalorder %s18, 3
      %p200 = pnand %p198, %p199
      %p201 = pneg %p200
      // Predicated region
      $region9: #{tpu_custom_call.1} parent=5 // pred_check
        _
      $region10: #{tpu_custom_call.1} parent=5 // pred_check_branch
        %203 = sbr.rel (%p200) target = $region12
      $region11: #{tpu_custom_call.1} parent=5 // pred_region
        %s204 = ssub.s32 %s18, 1
        // Predicated region
        $region13: #{tpu_custom_call.1} parent=11 // pred_check
          %p205 = pneg %p143
        $region14: #{tpu_custom_call.1} parent=11 // pred_check_branch
          %207 = sbr.rel (%p205) target = $region16
        $region15: #{tpu_custom_call.1} parent=11 // pred_region
          _
        $region16: #{tpu_custom_call.1} parent=11 // pred_fallthru
          _
        // Predicated region
        $region17: #{tpu_custom_call.1} parent=11 // pred_check
          %p208 = pneg %p164
        $region18: #{tpu_custom_call.1} parent=11 // pred_check_branch
          %210 = sbr.rel (%p208) target = $region20
        $region19: #{tpu_custom_call.1} parent=11 // pred_region
          _
        $region20: #{tpu_custom_call.1} parent=11 // pred_fallthru
          _
      $region12: #{tpu_custom_call.1} parent=5 // pred_fallthru
        _
      %p211 = scmp.lt.s32.totalorder %s18, 2
      // Predicated region
      $region21: #{tpu_custom_call.1} parent=5 // pred_check
        %p212 = pneg %p211
      $region22: #{tpu_custom_call.1} parent=5 // pred_check_branch
        %214 = sbr.rel (%p212) target = $region24
      $region23: #{tpu_custom_call.1} parent=5 // pred_region
        // Predicated region
        $region25: #{tpu_custom_call.1} parent=23 // pred_check
          %p215 = pneg %p38
        $region26: #{tpu_custom_call.1} parent=23 // pred_check_branch
          %217 = sbr.rel (%p215) target = $region28
        $region27: #{tpu_custom_call.1} parent=23 // pred_region
          %s218 = sand.u32 %s28, 1
          %s219 = scalar_lea.sflag [#allocation3], %s218
          %s220 = sand.u32 %s28, 1
          %s221 = smul.addr %s220, 4
          %s222 = scalar_lea.vmem [#allocation2], %s221
          %s224 = ssub.s32 64, 64
          %225 = vsyncadd %s219, %s224
          %s226 = smul.addr %s18, 64
          %s227 = scalar_lea.hbm %s0, %s226
          %s229 = sshll.u32 %s222, 4
          %s230 = int_to_ptr.vmem [resolvable:$true] %s229
          %232 = dma.hbm_to_vmem [thread:$0]  %s227, 64, %s230, %s219
        $region28: #{tpu_custom_call.1} parent=23 // pred_fallthru
          _
        // Predicated region
        $region29: #{tpu_custom_call.1} parent=23 // pred_check
          %p233 = pneg %p64
        $region30: #{tpu_custom_call.1} parent=23 // pred_check_branch
          %235 = sbr.rel (%p233) target = $region32
        $region31: #{tpu_custom_call.1} parent=23 // pred_region
          %p236 = scmp.lt.s32.totalorder %s18, 1
          %s237 = scalar_select %p236, %s18, 1
          %s238 = smul.addr %s237, 8
          %s239 = scalar_lea.vmem %s1, %s238
        $region32: #{tpu_custom_call.1} parent=23 // pred_fallthru
          _
        // Predicated region
        $region33: #{tpu_custom_call.1} parent=23 // pred_check
          %p240 = pneg %p90
        $region34: #{tpu_custom_call.1} parent=23 // pred_check_branch
          %242 = sbr.rel (%p240) target = $region36
        $region35: #{tpu_custom_call.1} parent=23 // pred_region
          %p243 = scmp.lt.s32.totalorder %s18, 1
          %s244 = scalar_select %p243, %s18, 1
          %s245 = smul.addr %s244, 8
          %s246 = scalar_lea.vmem %s2, %s245
        $region36: #{tpu_custom_call.1} parent=23 // pred_fallthru
          _
        // Predicated region
        $region37: #{tpu_custom_call.1} parent=23 // pred_check
          %p247 = pneg %p116
        $region38: #{tpu_custom_call.1} parent=23 // pred_check_branch
          %249 = sbr.rel (%p247) target = $region40
        $region39: #{tpu_custom_call.1} parent=23 // pred_region
          %p250 = scmp.lt.s32.totalorder %s18, 1
          %s251 = scalar_select %p250, %s18, 1
          %s252 = smul.addr %s251, 8
          %s253 = scalar_lea.vmem %s3, %s252
        $region40: #{tpu_custom_call.1} parent=23 // pred_fallthru
          _
      $region24: #{tpu_custom_call.1} parent=5 // pred_fallthru
        _
      %p254 = scmp.le.s32.totalorder 1, %s18
      %p255 = scmp.lt.s32.totalorder %s18, 3
      %p256 = pnand %p254, %p255
      %p257 = pneg %p256
      // Predicated region
      $region41: #{tpu_custom_call.1} parent=5 // pred_check
        _
      $region42: #{tpu_custom_call.1} parent=5 // pred_check_branch
        %259 = sbr.rel (%p256) target = $region44
      $region43: #{tpu_custom_call.1} parent=5 // pred_region
        %s260 = ssub.s32 %s18, 1
        %s261 = sand.u32 %s31, 1
        %s262 = scalar_lea.sflag [#allocation3], %s261
        %s263 = sand.u32 %s31, 1
        %s264 = smul.addr %s263, 4
        %s265 = scalar_lea.vmem [#allocation2], %s264
        // Predicated region
        $region45: #{tpu_custom_call.1} parent=43 // pred_check
          %p266 = pneg %p44
        $region46: #{tpu_custom_call.1} parent=43 // pred_check_branch
          %268 = sbr.rel (%p266) target = $region48
        $region47: #{tpu_custom_call.1} parent=43 // pred_region
          %269 = dma.done %s262, 64
        $region48: #{tpu_custom_call.1} parent=43 // pred_fallthru
          _
        %s270 = sand.u32 %s31, 1
        %s271 = scalar_lea.sflag [#allocation3], %s270
        %s272 = sand.u32 %s31, 1
        %s273 = smul.addr %s272, 4
        %s274 = scalar_lea.vmem [#allocation2], %s273
        %p275 = pneg %p44
        %p276 = pneg %p41
        %p277 = scmp.lt.s32.totalorder %s23, 1
        %s278 = scalar_select %p277, %s23, 1
        %s279 = smul.addr %s278, 8
        %s280 = scalar_lea.vmem %s1, %s279
        %p281 = pneg %p70
        %p282 = pneg %p67
        %p283 = scmp.lt.s32.totalorder %s23, 1
        %s284 = scalar_select %p283, %s23, 1
        %s285 = smul.addr %s284, 8
        %s286 = scalar_lea.vmem %s2, %s285
        %p287 = pneg %p96
        %p288 = pneg %p93
        %p289 = scmp.lt.s32.totalorder %s23, 1
        %s290 = scalar_select %p289, %s23, 1
        %s291 = smul.addr %s290, 8
        %s292 = scalar_lea.vmem %s3, %s291
        %p293 = pneg %p122
        %p294 = pneg %p119
        %p295 = pneg %p143
        %p296 = pneg %p140
        %p297 = pneg %p164
        %p298 = pneg %p161
        %p299 = pneg %p190
        %p300 = pneg %p187
        %s301 = sand.u32 %s177, 1
        %s302 = scalar_lea.sflag [#allocation4], %s301
        %s303 = sand.u32 %s177, 1
        %s304 = smul.addr %s303, 16
        %s305 = scalar_lea.vmem [#allocation5], %s304
        %p306 = scmp.lt.s32.totalorder %s23, 1
        %s307 = scalar_select %p306, %s23, 1
        %s308 = smul.addr %s307, 8
        %s309 = scalar_lea.vmem %s1, %s308
        %p310 = scmp.lt.s32.totalorder %s23, 1
        %s311 = scalar_select %p310, %s23, 1
        %s312 = smul.addr %s311, 8
        %s313 = scalar_lea.vmem %s2, %s312
        %p314 = scmp.lt.s32.totalorder %s23, 1
        %s315 = scalar_select %p314, %s23, 1
        %s316 = smul.addr %s315, 8
        %s317 = scalar_lea.vmem %s3, %s316
        %v319 = vld [vmem:[%s265] sm:$0xf]
        %v320 = vld [vmem:[%s309] sm:$0xff]
        %v321 = vld [vmem:[%s4] sm:$0xf]
        %v322 = vld [vmem:[%s4 + $0x4] sm:$0xf]
        %v323 = vld [vmem:[%s4 + $0x8] sm:$0xf]
        %v324 = vld [vmem:[%s4 + $0xc] sm:$0xf]
        %v325 = vld [vmem:[%s4 + $0x10] sm:$0xf]
        %v326 = vld [vmem:[%s5] sm:$0x1]
        %v328 = vlaneseq
        %v329 = vshrl.u32 %v328, 7
        %v330 = vsub.s32 0, %v329
        %v331 = vrot.slane %v326, %v330
        %v338 = vunpack.c.l.b16 %v321
        %v339 = vunpack.c.l.b16 %v322
        %v340 = vunpack.c.l.b16 %v323
        %v341 = vunpack.c.l.b16 %v324
        %v342 = vunpack.c.l.b16 %v325
        %v343 = vpack.c.b16 %v339, %v338
        %v344 = vpack.c.b16 %v341, %v340
        %v345 = vpack.c.b16 %v342, %v342
        %vm348 = vcmask 326656
        %v350 = vsel %vm348, %v319, 0
        %vm352 = vcmask 1043456
        %v354 = vsel %vm352, %v345, 0
        %356 = vmatprep.subr.bf16.mxu0 0
        %357 = vmatpush1.bf16.msra.mxu0 %v343
        %358 = vmatprep.subr.bf16.mxu0 0
        %359 = vmatpush1.bf16.msra.mxu0 %v344
        %360 = vmatprep.subr.bf16.mxu0 0
        %361 = vmatpush1.bf16.msra.mxu0 %v354
        %362 = vmatprep.subr.bf16.mxu0 0
        %363 = vmatpush1.bf16.msra.mxu0 0
        %364 = vmatprep.subr.bf16.mxu0 0
        %365 = vmatpush1.bf16.msra.mxu0 0
        %366 = vmatprep.subr.bf16.mxu0 0
        %367 = vmatpush1.bf16.msra.mxu0 0
        %368 = vmatprep.subr.bf16.mxu0 0
        %369 = vmatpush1.bf16.msra.mxu0 0
        %370 = vmatprep.subr.bf16.mxu0 0
        %371 = vmatpush1.bf16.msra.mxu0 0
        %372 = vmatprep.subr.bf16.mxu0 0
        %373 = vmatpush1.bf16.msra.mxu0 0
        %374 = vmatprep.subr.bf16.mxu0 0
        %375 = vmatpush1.bf16.msra.mxu0 0
        %376 = vmatprep.subr.bf16.mxu0 0
        %377 = vmatpush1.bf16.msra.mxu0 0
        %378 = vmatprep.subr.bf16.mxu0 0
        %379 = vmatpush1.bf16.msra.mxu0 0
        %380 = vmatprep.subr.bf16.mxu0 0
        %381 = vmatpush1.bf16.msra.mxu0 0
        %382 = vmatprep.subr.bf16.mxu0 0
        %383 = vmatpush1.bf16.msra.mxu0 0
        %384 = vmatprep.subr.bf16.mxu0 0
        %385 = vmatpush1.bf16.msra.mxu0 0
        %386 = vmatprep.subr.bf16.mxu0 0
        %387 = vmatpush1.bf16.msra.mxu0 0
        %388 = vmatprep.mubr.bf16.mxu0 0
        %389 = vmatmul.mubr.bf16.gmra.mrb[0].mxu0 %v350
        %v390 = vpop.f32.mrb[0].mxu0
        %v391 = vadd.f32 %v331, %v390
        %v392 = vpop.f32.mrb[0].mxu0
        %v393 = vpop.f32.mrb[0].mxu0
        %v394 = vpop.f32.mrb[0].mxu0
        %395 = vdwg.mxu0
        %v396 = vsub.f32 0.0, %v391
        %v397 = vmul.f32 %v396, 1.442695
        %v398 = vpow.pop %v397
        %v399 = vadd.f32 %v398, 1.0
        %v400 = vrcp.pop %v399
        %vm401 = vcmp.eq.s32.totalorder %v320, 3
        %v402 = vsel %vm401, 1, 0
        %v403 = vcvt.s32.f32 %v402
        %405 = vrot.lane.b32.xlu0 %v400, 64
        %v406 = vpop.permute.xlu0 %405
        %v408 = vmul.f32 %v403, %v406
        %v409 = vlaneseq
        %v410 = vand.u32 %v409, 127
        %vm411 = vcmp.lt.s32.totalorder %v410, 64
        %v412 = vsel %vm411, %v391, -1e+30
        %413 = vmax.xlane.f32.xlu0 %v412
        %v414 = vpop.xlane.xlu0 %413
        %v415 = vsub.f32 %v412, %v414
        %v416 = vmul.f32 %v415, 1.442695
        %v417 = vpow.pop %v416
        %418 = vadd.xlane.f32.xlu0 %v417
        %v419 = vpop.xlane.xlu0 %418
        %v420 = vrcp.pop %v419
        %v421 = vmul.f32 %v417, %v420
        %v422 = vsub.f32 1.0, %v408
        %424 = vset.pattern.permute.xlu0 0
        %425 = vperm.xlu0 %424, %v422
        %v426 = vpop.permute.xlu0 %425
        %v428 = vmul.f32 %v421, %v426
        %429 = vst [vmem:[%s305] sm:$0xff] %v428
        %v430 = vld [vmem:[%s313] sm:$0xff]
        %432 = vset.pattern.permute.xlu0 0
        %433 = vperm.xlu0 %432, %v408
        %v434 = vpop.permute.xlu0 %433
        %v436 = vmul.f32 %v430, %v434
        %v437 = vld [vmem:[%s317] sm:$0xff]
        %439 = vset.pattern.permute.xlu0 0
        %440 = vperm.xlu0 %439, %v436
        %v441 = vpop.permute.xlu0 %440
        %v443 = vlaneseq
        %v444 = vshrl.u32 %v443, 7
        %v445 = vsub.s32 0, %v444
        %v446 = vrot.slane %v437, %v445
        %v447 = vmul.f32 %v441, %v446
        %448 = vset.pattern.permute.xlu0 1
        %449 = vperm.xlu0 %448, %v436
        %v450 = vpop.permute.xlu0 %449
        %v452 = vlaneseq
        %v453 = vshrl.u32 %v452, 7
        %v454 = vsub.s32 1, %v453
        %v455 = vrot.slane %v437, %v454
        %v456 = vmul.f32 %v450, %v455
        %v457 = vadd.f32 %v447, %v456
        %458 = vset.pattern.permute.xlu0 2
        %459 = vperm.xlu0 %458, %v436
        %v460 = vpop.permute.xlu0 %459
        %v462 = vlaneseq
        %v463 = vshrl.u32 %v462, 7
        %v464 = vsub.s32 2, %v463
        %v465 = vrot.slane %v437, %v464
        %v466 = vmul.f32 %v460, %v465
        %v467 = vadd.f32 %v457, %v466
        %468 = vset.pattern.permute.xlu0 3
        %469 = vperm.xlu0 %468, %v436
        %v470 = vpop.permute.xlu0 %469
        %v472 = vlaneseq
        %v473 = vshrl.u32 %v472, 7
        %v474 = vsub.s32 3, %v473
        %v475 = vrot.slane %v437, %v474
        %v476 = vmul.f32 %v470, %v475
        %v477 = vadd.f32 %v467, %v476
        %478 = vset.pattern.permute.xlu0 4
        %479 = vperm.xlu0 %478, %v436
        %v480 = vpop.permute.xlu0 %479
        %v482 = vlaneseq
        %v483 = vshrl.u32 %v482, 7
        %v484 = vsub.s32 4, %v483
        %v485 = vrot.slane %v437, %v484
        %v486 = vmul.f32 %v480, %v485
        %v487 = vadd.f32 %v477, %v486
        %488 = vset.pattern.permute.xlu0 5
        %489 = vperm.xlu0 %488, %v436
        %v490 = vpop.permute.xlu0 %489
        %v492 = vlaneseq
        %v493 = vshrl.u32 %v492, 7
        %v494 = vsub.s32 5, %v493
        %v495 = vrot.slane %v437, %v494
        %v496 = vmul.f32 %v490, %v495
        %v497 = vadd.f32 %v487, %v496
        %498 = vset.pattern.permute.xlu0 6
        %499 = vperm.xlu0 %498, %v436
        %v500 = vpop.permute.xlu0 %499
        %v502 = vlaneseq
        %v503 = vshrl.u32 %v502, 7
        %v504 = vsub.s32 6, %v503
        %v505 = vrot.slane %v437, %v504
        %v506 = vmul.f32 %v500, %v505
        %v507 = vadd.f32 %v497, %v506
        %508 = vset.pattern.permute.xlu0 7
        %509 = vperm.xlu0 %508, %v436
        %v510 = vpop.permute.xlu0 %509
        %v512 = vlaneseq
        %v513 = vshrl.u32 %v512, 7
        %v514 = vsub.s32 7, %v513
        %v515 = vrot.slane %v437, %v514
        %v516 = vmul.f32 %v510, %v515
        %v517 = vadd.f32 %v507, %v516
        %518 = vst [vmem:[%s305 + $0x8] sm:$0xff] %v517
        %s519 = sand.u32 %s177, 1
        %s520 = scalar_lea.sflag [#allocation4], %s519
        %s521 = sand.u32 %s177, 1
        %s522 = smul.addr %s521, 16
        %s523 = scalar_lea.vmem [#allocation5], %s522
        // Predicated region
        $region49: #{tpu_custom_call.1} parent=43 // pred_check
          %p524 = pneg %p187
        $region50: #{tpu_custom_call.1} parent=43 // pred_check_branch
          %526 = sbr.rel (%p524) target = $region52
        $region51: #{tpu_custom_call.1} parent=43 // pred_region
          %s528 = ssub.s32 256, 256
          %529 = vsyncadd %s520, %s528
          %s530 = smul.addr %s23, 2
          %s531 = smul.addr %s530, 128
          %s532 = scalar_lea.hbm %s6, %s531
          %s534 = sshll.u32 %s523, 4
          %s535 = int_to_ptr.vmem [resolvable:$true] %s534
          %537 = dma.vmem_to_hbm [thread:$0]  %s535, 256, %s532, %s520
        $region52: #{tpu_custom_call.1} parent=43 // pred_fallthru
          _
      $region44: #{tpu_custom_call.1} parent=5 // pred_fallthru
        _
      %p538 = scmp.le.s32.totalorder 2, %s18
      // Predicated region
      $region53: #{tpu_custom_call.1} parent=5 // pred_check
        %p539 = pneg %p538
      $region54: #{tpu_custom_call.1} parent=5 // pred_check_branch
        %541 = sbr.rel (%p539) target = $region56
      $region55: #{tpu_custom_call.1} parent=5 // pred_region
        %s542 = ssub.s32 %s18, 2
        // Predicated region
        $region57: #{tpu_custom_call.1} parent=55 // pred_check
          %p543 = pneg %p193
        $region58: #{tpu_custom_call.1} parent=55 // pred_check_branch
          %545 = sbr.rel (%p543) target = $region60
        $region59: #{tpu_custom_call.1} parent=55 // pred_region
          %s546 = sand.u32 %s178, 1
          %s547 = scalar_lea.sflag [#allocation4], %s546
          %s548 = sand.u32 %s178, 1
          %s549 = smul.addr %s548, 16
          %s550 = scalar_lea.vmem [#allocation5], %s549
          %551 = dma.done %s547, 256
        $region60: #{tpu_custom_call.1} parent=55 // pred_fallthru
          _
      $region56: #{tpu_custom_call.1} parent=5 // pred_fallthru
        _
    $region6: #{tpu_custom_call.1} parent=1 // loop_footer
      %s22 = sadd.s32 1, %s18
    $region7: #{tpu_custom_call.1} parent=1 // loop_footer_branch
      %17 = sbr.rel target = $region3
    $region8: #{tpu_custom_call.1} parent=1 // loop_exit
      _
    %552 = vsyncpa [#allocation3], 1
    %s553 = scalar_lea.sflag [#allocation3], 1
    %554 = vsyncpa %s553, 1
    %555 = vsyncpa [#allocation4], 1
    %s556 = scalar_lea.sflag [#allocation4], 1
    %557 = vsyncpa %s556, 1

// kernel: tpu_custom_call.1
$region0: #{tpu_custom_call.1}
  #allocation0 [shape = 'u32[]', space=smem, size = 0x4, offset = 0x4, fixed_abs, tag = 'smem constant byte address 0x4 - core index']
  #allocation1 [shape = 'u32[144,128]{1,0:T(1,128)}', space=vmem, size = 0x12000, scoped, tag = 'internal scratch']
  %s0 = inlined_call_operand.hbm [shape: bf16[16,40], index: 0, kind: input, shape index: {}]
  %s1 = inlined_call_operand.vmem [shape: s32[16,1], index: 1, kind: input, shape index: {}]
  %s2 = inlined_call_operand.vmem [shape: f32[16,8], index: 2, kind: input, shape index: {}]
  %s3 = inlined_call_operand.vmem [shape: f32[2,8,128], index: 3, kind: input, shape index: {}]
  %s4 = inlined_call_operand.vmem [shape: bf16[40,128], index: 4, kind: input, shape index: {}]
  %s5 = inlined_call_operand.vmem [shape: f32[1,128], index: 5, kind: input, shape index: {}]
  %s6 = inlined_call_operand.hbm [shape: f32[16,256], index: 6, kind: output, shape index: {}]
  %s7 = sld [smem:[#allocation0]]
  $region61: #{tpu_custom_call.1} parent=0
    _
  %s9 = ssub.s32 1, %s7
  %s10 = scalar_select 0, %s9, %s7
  $region1: #{tpu_custom_call.1} parent=0
    #allocation2 [shape = 'u8[4096]{0}', space=vmem, size = 0x1000, scoped, tag = 'input window, operand 0']
    #allocation3 [shape = 's32[2]{0}', space=sflag, size = 0x8, scoped, tag = 'scoped memory for tpu_custom_call.1']
    #allocation4 [shape = 's32[2]{0}', space=sflag, size = 0x8, scoped, tag = 'scoped memory for tpu_custom_call.1']
    #allocation5 [shape = 'u8[16384]{0}', space=vmem, size = 0x4000, scoped, tag = 'output window, operand 0']
    %11 = vsyncpa [#allocation3], 0
    %s12 = scalar_lea.sflag [#allocation3], 1
    %13 = vsyncpa %s12, 0
    %14 = vsyncpa [#allocation4], 0
    %s15 = scalar_lea.sflag [#allocation4], 1
    %16 = vsyncpa %s15, 0
    loop: start=0, step=1, limit=4
    $region2: #{tpu_custom_call.1} parent=1 // loop_pre_header
      _
    $region3: #{tpu_custom_call.1} parent=1 // loop_header
      %s18 = sphi 0, %s22
      %p19 = scmp.ge.s32.totalorder %s18, 4
      %s28 = sphi 0, %s30
      %s31 = sphi 0, %s28
      %s32 = sphi 0, %s31
      %s48 = sphi 0, %s32
      %s54 = sphi 0, %s56
      %s57 = sphi 0, %s54
      %s58 = sphi 0, %s57
      %s74 = sphi 0, %s58
      %s80 = sphi 0, %s82
      %s83 = sphi 0, %s80
      %s84 = sphi 0, %s83
      %s100 = sphi 0, %s84
      %s106 = sphi 0, %s108
      %s109 = sphi 0, %s106
      %s110 = sphi 0, %s109
      %s126 = sphi 0, %s110
      %s130 = sphi 0, %s130
      %s132 = sphi 0, %s130
      %s133 = sphi 0, %s132
      %s147 = sphi 0, %s133
      %s151 = sphi 0, %s151
      %s153 = sphi 0, %s151
      %s154 = sphi 0, %s153
      %s168 = sphi 0, %s154
      %s174 = sphi 0, %s176
      %s177 = sphi 0, %s174
      %s178 = sphi 0, %s177
      %s194 = sphi 0, %s178
    $region4: #{tpu_custom_call.1} parent=1 // loop_header_branch
      %21 = sbr.rel (%p19) target = $region8
    $region5: #{tpu_custom_call.1} parent=1 // loop_body
      %s23 = ssub.s32 %s18, 1
      %s24 = ssub.s32 %s18, 2
      %s25 = sadd.s32 %s18, 1
      %s26 = ssub.s32 %s18, %s25
      %p27 = scmp.eq.s32.totalorder %s26, 0
      %s29 = sadd.s32 %s28, 1
      %s30 = scalar_select %p27, %s28, %s29
      %p33 = pneg %p27
      %p34 = scmp.eq.s32.totalorder %s18, 1
      %p35 = por %p33, %p34
      %p36 = scmp.ne.s32.totalorder %s28, %s31
      %p37 = scmp.eq.s32.totalorder %s18, 0
      %p38 = por %p36, %p37
      %p39 = scmp.ne.s32.totalorder %s28, %s31
      %p40 = scmp.eq.s32.totalorder %s23, 1
      %p41 = por %p39, %p40
      %p42 = scmp.ne.s32.totalorder %s31, %s32
      %p43 = scmp.eq.s32.totalorder %s23, 0
      %p44 = por %p42, %p43
      %p45 = scmp.ne.s32.totalorder %s31, %s32
      %p46 = scmp.eq.s32.totalorder %s24, 1
      %p47 = por %p45, %p46
      %p49 = scmp.ne.s32.totalorder %s32, %s48
      %p50 = scmp.eq.s32.totalorder %s24, 0
      %p51 = por %p49, %p50
      %s52 = ssub.s32 %s18, %s25
      %p53 = scmp.eq.s32.totalorder %s52, 0
      %s55 = sadd.s32 %s54, 1
      %s56 = scalar_select %p53, %s54, %s55
      %p59 = pneg %p53
      %p60 = scmp.eq.s32.totalorder %s18, 1
      %p61 = por %p59, %p60
      %p62 = scmp.ne.s32.totalorder %s54, %s57
      %p63 = scmp.eq.s32.totalorder %s18, 0
      %p64 = por %p62, %p63
      %p65 = scmp.ne.s32.totalorder %s54, %s57
      %p66 = scmp.eq.s32.totalorder %s23, 1
      %p67 = por %p65, %p66
      %p68 = scmp.ne.s32.totalorder %s57, %s58
      %p69 = scmp.eq.s32.totalorder %s23, 0
      %p70 = por %p68, %p69
      %p71 = scmp.ne.s32.totalorder %s57, %s58
      %p72 = scmp.eq.s32.totalorder %s24, 1
      %p73 = por %p71, %p72
      %p75 = scmp.ne.s32.totalorder %s58, %s74
      %p76 = scmp.eq.s32.totalorder %s24, 0
      %p77 = por %p75, %p76
      %s78 = ssub.s32 %s18, %s25
      %p79 = scmp.eq.s32.totalorder %s78, 0
      %s81 = sadd.s32 %s80, 1
      %s82 = scalar_select %p79, %s80, %s81
      %p85 = pneg %p79
      %p86 = scmp.eq.s32.totalorder %s18, 1
      %p87 = por %p85, %p86
      %p88 = scmp.ne.s32.totalorder %s80, %s83
      %p89 = scmp.eq.s32.totalorder %s18, 0
      %p90 = por %p88, %p89
      %p91 = scmp.ne.s32.totalorder %s80, %s83
      %p92 = scmp.eq.s32.totalorder %s23, 1
      %p93 = por %p91, %p92
      %p94 = scmp.ne.s32.totalorder %s83, %s84
      %p95 = scmp.eq.s32.totalorder %s23, 0
      %p96 = por %p94, %p95
      %p97 = scmp.ne.s32.totalorder %s83, %s84
      %p98 = scmp.eq.s32.totalorder %s24, 1
      %p99 = por %p97, %p98
      %p101 = scmp.ne.s32.totalorder %s84, %s100
      %p102 = scmp.eq.s32.totalorder %s24, 0
      %p103 = por %p101, %p102
      %s104 = ssub.s32 %s18, %s25
      %p105 = scmp.eq.s32.totalorder %s104, 0
      %s107 = sadd.s32 %s106, 1
      %s108 = scalar_select %p105, %s106, %s107
      %p111 = pneg %p105
      %p112 = scmp.eq.s32.totalorder %s18, 1
      %p113 = por %p111, %p112
      %p114 = scmp.ne.s32.totalorder %s106, %s109
      %p115 = scmp.eq.s32.totalorder %s18, 0
      %p116 = por %p114, %p115
      %p117 = scmp.ne.s32.totalorder %s106, %s109
      %p118 = scmp.eq.s32.totalorder %s23, 1
      %p119 = por %p117, %p118
      %p120 = scmp.ne.s32.totalorder %s109, %s110
      %p121 = scmp.eq.s32.totalorder %s23, 0
      %p122 = por %p120, %p121
      %p123 = scmp.ne.s32.totalorder %s109, %s110
      %p124 = scmp.eq.s32.totalorder %s24, 1
      %p125 = por %p123, %p124
      %p127 = scmp.ne.s32.totalorder %s110, %s126
      %p128 = scmp.eq.s32.totalorder %s24, 0
      %p129 = por %p127, %p128
      %s131 = sadd.s32 %s130, 1
      %p134 = scmp.eq.s32.totalorder %s18, 1
      %p135 = scmp.ne.s32.totalorder %s130, %s132
      %p136 = scmp.eq.s32.totalorder %s18, 0
      %p137 = por %p135, %p136
      %p138 = scmp.ne.s32.totalorder %s130, %s132
      %p139 = scmp.eq.s32.totalorder %s23, 1
      %p140 = por %p138, %p139
      %p141 = scmp.ne.s32.totalorder %s132, %s133
      %p142 = scmp.eq.s32.totalorder %s23, 0
      %p143 = por %p141, %p142
      %p144 = scmp.ne.s32.totalorder %s132, %s133
      %p145 = scmp.eq.s32.totalorder %s24, 1
      %p146 = por %p144, %p145
      %p148 = scmp.ne.s32.totalorder %s133, %s147
      %p149 = scmp.eq.s32.totalorder %s24, 0
      %p150 = por %p148, %p149
      %s152 = sadd.s32 %s151, 1
      %p155 = scmp.eq.s32.totalorder %s18, 1
      %p156 = scmp.ne.s32.totalorder %s151, %s153
      %p157 = scmp.eq.s32.totalorder %s18, 0
      %p158 = por %p156, %p157
      %p159 = scmp.ne.s32.totalorder %s151, %s153
      %p160 = scmp.eq.s32.totalorder %s23, 1
      %p161 = por %p159, %p160
      %p162 = scmp.ne.s32.totalorder %s153, %s154
      %p163 = scmp.eq.s32.totalorder %s23, 0
      %p164 = por %p162, %p163
      %p165 = scmp.ne.s32.totalorder %s153, %s154
      %p166 = scmp.eq.s32.totalorder %s24, 1
      %p167 = por %p165, %p166
      %p169 = scmp.ne.s32.totalorder %s154, %s168
      %p170 = scmp.eq.s32.totalorder %s24, 0
      %p171 = por %p169, %p170
      %s172 = ssub.s32 %s18, %s25
      %p173 = scmp.eq.s32.totalorder %s172, 0
      %s175 = sadd.s32 %s174, 1
      %s176 = scalar_select %p173, %s174, %s175
      %p179 = pneg %p173
      %p180 = scmp.eq.s32.totalorder %s18, 1
      %p181 = por %p179, %p180
      %p182 = scmp.ne.s32.totalorder %s174, %s177
      %p183 = scmp.eq.s32.totalorder %s18, 0
      %p184 = por %p182, %p183
      %p185 = scmp.ne.s32.totalorder %s174, %s177
      %p186 = scmp.eq.s32.totalorder %s23, 1
      %p187 = por %p185, %p186
      %p188 = scmp.ne.s32.totalorder %s177, %s178
      %p189 = scmp.eq.s32.totalorder %s23, 0
      %p190 = por %p188, %p189
      %p191 = scmp.ne.s32.totalorder %s177, %s178
      %p192 = scmp.eq.s32.totalorder %s24, 1
      %p193 = por %p191, %p192
      %p195 = scmp.ne.s32.totalorder %s178, %s194
      %p196 = scmp.eq.s32.totalorder %s24, 0
      %p197 = por %p195, %p196
      %p198 = scmp.le.s32.totalorder 1, %s18
      %p199 = scmp.lt.s32.totalorder %s18, 3
      %p200 = pnand %p198, %p199
      %p201 = pneg %p200
      // Predicated region
      $region9: #{tpu_custom_call.1} parent=5 // pred_check
        _
      $region10: #{tpu_custom_call.1} parent=5 // pred_check_branch
        %203 = sbr.rel (%p200) target = $region12
      $region11: #{tpu_custom_call.1} parent=5 // pred_region
        %s204 = ssub.s32 %s18, 1
        // Predicated region
        $region13: #{tpu_custom_call.1} parent=11 // pred_check
          %p205 = pneg %p143
        $region14: #{tpu_custom_call.1} parent=11 // pred_check_branch
          %207 = sbr.rel (%p205) target = $region16
        $region15: #{tpu_custom_call.1} parent=11 // pred_region
          _
        $region16: #{tpu_custom_call.1} parent=11 // pred_fallthru
          _
        // Predicated region
        $region17: #{tpu_custom_call.1} parent=11 // pred_check
          %p208 = pneg %p164
        $region18: #{tpu_custom_call.1} parent=11 // pred_check_branch
          %210 = sbr.rel (%p208) target = $region20
        $region19: #{tpu_custom_call.1} parent=11 // pred_region
          _
        $region20: #{tpu_custom_call.1} parent=11 // pred_fallthru
          _
      $region12: #{tpu_custom_call.1} parent=5 // pred_fallthru
        _
      %p211 = scmp.lt.s32.totalorder %s18, 2
      // Predicated region
      $region21: #{tpu_custom_call.1} parent=5 // pred_check
        %p212 = pneg %p211
      $region22: #{tpu_custom_call.1} parent=5 // pred_check_branch
        %214 = sbr.rel (%p212) target = $region24
      $region23: #{tpu_custom_call.1} parent=5 // pred_region
        // Predicated region
        $region25: #{tpu_custom_call.1} parent=23 // pred_check
          %p215 = pneg %p38
        $region26: #{tpu_custom_call.1} parent=23 // pred_check_branch
          %217 = sbr.rel (%p215) target = $region28
        $region27: #{tpu_custom_call.1} parent=23 // pred_region
          %s218 = sand.u32 %s28, 1
          %s219 = scalar_lea.sflag [#allocation3], %s218
          %s220 = sand.u32 %s28, 1
          %s221 = smul.addr %s220, 4
          %s222 = scalar_lea.vmem [#allocation2], %s221
          %s224 = ssub.s32 64, 64
          %225 = vsyncadd %s219, %s224
          %s226 = smul.addr %s18, 64
          %s227 = scalar_lea.hbm %s0, %s226
          %s229 = sshll.u32 %s222, 4
          %s230 = int_to_ptr.vmem [resolvable:$true] %s229
          %232 = dma.hbm_to_vmem [thread:$0]  %s227, 64, %s230, %s219
        $region28: #{tpu_custom_call.1} parent=23 // pred_fallthru
          _
        // Predicated region
        $region29: #{tpu_custom_call.1} parent=23 // pred_check
          %p233 = pneg %p64
        $region30: #{tpu_custom_call.1} parent=23 // pred_check_branch
          %235 = sbr.rel (%p233) target = $region32
        $region31: #{tpu_custom_call.1} parent=23 // pred_region
          %p236 = scmp.lt.s32.totalorder %s18, 1
          %s237 = scalar_select %p236, %s18, 1
          %s238 = smul.addr %s237, 8
          %s239 = scalar_lea.vmem %s1, %s238
        $region32: #{tpu_custom_call.1} parent=23 // pred_fallthru
          _
        // Predicated region
        $region33: #{tpu_custom_call.1} parent=23 // pred_check
          %p240 = pneg %p90
        $region34: #{tpu_custom_call.1} parent=23 // pred_check_branch
          %242 = sbr.rel (%p240) target = $region36
        $region35: #{tpu_custom_call.1} parent=23 // pred_region
          %p243 = scmp.lt.s32.totalorder %s18, 1
          %s244 = scalar_select %p243, %s18, 1
          %s245 = smul.addr %s244, 8
          %s246 = scalar_lea.vmem %s2, %s245
        $region36: #{tpu_custom_call.1} parent=23 // pred_fallthru
          _
        // Predicated region
        $region37: #{tpu_custom_call.1} parent=23 // pred_check
          %p247 = pneg %p116
        $region38: #{tpu_custom_call.1} parent=23 // pred_check_branch
          %249 = sbr.rel (%p247) target = $region40
        $region39: #{tpu_custom_call.1} parent=23 // pred_region
          %p250 = scmp.lt.s32.totalorder %s18, 1
          %s251 = scalar_select %p250, %s18, 1
          %s252 = smul.addr %s251, 8
          %s253 = scalar_lea.vmem %s3, %s252
        $region40: #{tpu_custom_call.1} parent=23 // pred_fallthru
          _
      $region24: #{tpu_custom_call.1} parent=5 // pred_fallthru
        _
      %p254 = scmp.le.s32.totalorder 1, %s18
      %p255 = scmp.lt.s32.totalorder %s18, 3
      %p256 = pnand %p254, %p255
      %p257 = pneg %p256
      // Predicated region
      $region41: #{tpu_custom_call.1} parent=5 // pred_check
        _
      $region42: #{tpu_custom_call.1} parent=5 // pred_check_branch
        %259 = sbr.rel (%p256) target = $region44
      $region43: #{tpu_custom_call.1} parent=5 // pred_region
        %s260 = ssub.s32 %s18, 1
        %s261 = sand.u32 %s31, 1
        %s262 = scalar_lea.sflag [#allocation3], %s261
        %s263 = sand.u32 %s31, 1
        %s264 = smul.addr %s263, 4
        %s265 = scalar_lea.vmem [#allocation2], %s264
        // Predicated region
        $region45: #{tpu_custom_call.1} parent=43 // pred_check
          %p266 = pneg %p44
        $region46: #{tpu_custom_call.1} parent=43 // pred_check_branch
          %268 = sbr.rel (%p266) target = $region48
        $region47: #{tpu_custom_call.1} parent=43 // pred_region
          %269 = dma.done %s262, 64
        $region48: #{tpu_custom_call.1} parent=43 // pred_fallthru
          _
        %s270 = sand.u32 %s31, 1
        %s271 = scalar_lea.sflag [#allocation3], %s270
        %s272 = sand.u32 %s31, 1
        %s273 = smul.addr %s272, 4
        %s274 = scalar_lea.vmem [#allocation2], %s273
        %p275 = pneg %p44
        %p276 = pneg %p41
        %p277 = scmp.lt.s32.totalorder %s23, 1
        %s278 = scalar_select %p277, %s23, 1
        %s279 = smul.addr %s278, 8
        %s280 = scalar_lea.vmem %s1, %s279
        %p281 = pneg %p70
        %p282 = pneg %p67
        %p283 = scmp.lt.s32.totalorder %s23, 1
        %s284 = scalar_select %p283, %s23, 1
        %s285 = smul.addr %s284, 8
        %s286 = scalar_lea.vmem %s2, %s285
        %p287 = pneg %p96
        %p288 = pneg %p93
        %p289 = scmp.lt.s32.totalorder %s23, 1
        %s290 = scalar_select %p289, %s23, 1
        %s291 = smul.addr %s290, 8
        %s292 = scalar_lea.vmem %s3, %s291
        %p293 = pneg %p122
        %p294 = pneg %p119
        %p295 = pneg %p143
        %p296 = pneg %p140
        %p297 = pneg %p164
        %p298 = pneg %p161
        %p299 = pneg %p190
        %p300 = pneg %p187
        %s301 = sand.u32 %s177, 1
        %s302 = scalar_lea.sflag [#allocation4], %s301
        %s303 = sand.u32 %s177, 1
        %s304 = smul.addr %s303, 16
        %s305 = scalar_lea.vmem [#allocation5], %s304
        %p306 = scmp.lt.s32.totalorder %s23, 1
        %s307 = scalar_select %p306, %s23, 1
        %s308 = smul.addr %s307, 8
        %s309 = scalar_lea.vmem %s1, %s308
        %p310 = scmp.lt.s32.totalorder %s23, 1
        %s311 = scalar_select %p310, %s23, 1
        %s312 = smul.addr %s311, 8
        %s313 = scalar_lea.vmem %s2, %s312
        %p314 = scmp.lt.s32.totalorder %s23, 1
        %s315 = scalar_select %p314, %s23, 1
        %s316 = smul.addr %s315, 8
        %s317 = scalar_lea.vmem %s3, %s316
        %v319 = vld [vmem:[%s265] sm:$0xf]
        %v320 = vld [vmem:[%s309] sm:$0xff]
        %v321 = vld [vmem:[%s4] sm:$0xf]
        %v322 = vld [vmem:[%s4 + $0x4] sm:$0xf]
        %v323 = vld [vmem:[%s4 + $0x8] sm:$0xf]
        %v324 = vld [vmem:[%s4 + $0xc] sm:$0xf]
        %v325 = vld [vmem:[%s4 + $0x10] sm:$0xf]
        %v326 = vld [vmem:[%s5] sm:$0x1]
        %v328 = vlaneseq
        %v329 = vshrl.u32 %v328, 7
        %v330 = vsub.s32 0, %v329
        %v331 = vrot.slane %v326, %v330
        %v338 = vunpack.c.l.b16 %v321
        %v339 = vunpack.c.l.b16 %v322
        %v340 = vunpack.c.l.b16 %v323
        %v341 = vunpack.c.l.b16 %v324
        %v342 = vunpack.c.l.b16 %v325
        %v343 = vpack.c.b16 %v339, %v338
        %v344 = vpack.c.b16 %v341, %v340
        %v345 = vpack.c.b16 %v342, %v342
        %vm348 = vcmask 326656
        %v350 = vsel %vm348, %v319, 0
        %vm352 = vcmask 1043456
        %v354 = vsel %vm352, %v345, 0
        %356 = vmatprep.subr.bf16.mxu0 0
        %357 = vmatpush1.bf16.msra.mxu0 %v343
        %358 = vmatprep.subr.bf16.mxu0 0
        %359 = vmatpush1.bf16.msra.mxu0 %v344
        %360 = vmatprep.subr.bf16.mxu0 0
        %361 = vmatpush1.bf16.msra.mxu0 %v354
        %362 = vmatprep.subr.bf16.mxu0 0
        %363 = vmatpush1.bf16.msra.mxu0 0
        %364 = vmatprep.subr.bf16.mxu0 0
        %365 = vmatpush1.bf16.msra.mxu0 0
        %366 = vmatprep.subr.bf16.mxu0 0
        %367 = vmatpush1.bf16.msra.mxu0 0
        %368 = vmatprep.subr.bf16.mxu0 0
        %369 = vmatpush1.bf16.msra.mxu0 0
        %370 = vmatprep.subr.bf16.mxu0 0
        %371 = vmatpush1.bf16.msra.mxu0 0
        %372 = vmatprep.subr.bf16.mxu0 0
        %373 = vmatpush1.bf16.msra.mxu0 0
        %374 = vmatprep.subr.bf16.mxu0 0
        %375 = vmatpush1.bf16.msra.mxu0 0
        %376 = vmatprep.subr.bf16.mxu0 0
        %377 = vmatpush1.bf16.msra.mxu0 0
        %378 = vmatprep.subr.bf16.mxu0 0
        %379 = vmatpush1.bf16.msra.mxu0 0
        %380 = vmatprep.subr.bf16.mxu0 0
        %381 = vmatpush1.bf16.msra.mxu0 0
        %382 = vmatprep.subr.bf16.mxu0 0
        %383 = vmatpush1.bf16.msra.mxu0 0
        %384 = vmatprep.subr.bf16.mxu0 0
        %385 = vmatpush1.bf16.msra.mxu0 0
        %386 = vmatprep.subr.bf16.mxu0 0
        %387 = vmatpush1.bf16.msra.mxu0 0
        %388 = vmatprep.mubr.bf16.mxu0 0
        %389 = vmatmul.mubr.bf16.gmra.mrb[0].mxu0 %v350
        %v390 = vpop.f32.mrb[0].mxu0
        %v391 = vadd.f32 %v331, %v390
        %v392 = vpop.f32.mrb[0].mxu0
        %v393 = vpop.f32.mrb[0].mxu0
        %v394 = vpop.f32.mrb[0].mxu0
        %395 = vdwg.mxu0
        %v396 = vsub.f32 0.0, %v391
        %v397 = vmul.f32 %v396, 1.442695
        %v398 = vpow.pop %v397
        %v399 = vadd.f32 %v398, 1.0
        %v400 = vrcp.pop %v399
        %vm401 = vcmp.eq.s32.totalorder %v320, 3
        %v402 = vsel %vm401, 1, 0
        %v403 = vcvt.s32.f32 %v402
        %405 = vrot.lane.b32.xlu0 %v400, 64
        %v406 = vpop.permute.xlu0 %405
        %v408 = vmul.f32 %v403, %v406
        %v409 = vlaneseq
        %v410 = vand.u32 %v409, 127
        %vm411 = vcmp.lt.s32.totalorder %v410, 64
        %v412 = vsel %vm411, %v391, -1e+30
        %413 = vmax.xlane.f32.xlu0 %v412
        %v414 = vpop.xlane.xlu0 %413
        %v415 = vsub.f32 %v412, %v414
        %v416 = vmul.f32 %v415, 1.442695
        %v417 = vpow.pop %v416
        %418 = vadd.xlane.f32.xlu0 %v417
        %v419 = vpop.xlane.xlu0 %418
        %v420 = vrcp.pop %v419
        %v421 = vmul.f32 %v417, %v420
        %v422 = vsub.f32 1.0, %v408
        %424 = vset.pattern.permute.xlu0 0
        %425 = vperm.xlu0 %424, %v422
        %v426 = vpop.permute.xlu0 %425
        %v428 = vmul.f32 %v421, %v426
        %429 = vst [vmem:[%s305] sm:$0xff] %v428
        %v430 = vld [vmem:[%s313] sm:$0xff]
        %432 = vset.pattern.permute.xlu0 0
        %433 = vperm.xlu0 %432, %v408
        %v434 = vpop.permute.xlu0 %433
        %v436 = vmul.f32 %v430, %v434
        %v437 = vld [vmem:[%s317] sm:$0xff]
        %439 = vset.pattern.permute.xlu0 0
        %440 = vperm.xlu0 %439, %v436
        %v441 = vpop.permute.xlu0 %440
        %v443 = vlaneseq
        %v444 = vshrl.u32 %v443, 7
        %v445 = vsub.s32 0, %v444
        %v446 = vrot.slane %v437, %v445
        %v447 = vmul.f32 %v441, %v446
        %448 = vset.pattern.permute.xlu0 1
        %449 = vperm.xlu0 %448, %v436
        %v450 = vpop.permute.xlu0 %449
        %v452 = vlaneseq
        %v453 = vshrl.u32 %v452, 7
        %v454 = vsub.s32 1, %v453
        %v455 = vrot.slane %v437, %v454
        %v456 = vmul.f32 %v450, %v455
        %v457 = vadd.f32 %v447, %v456
        %458 = vset.pattern.permute.xlu0 2
        %459 = vperm.xlu0 %458, %v436
        %v460 = vpop.permute.xlu0 %459
        %v462 = vlaneseq
        %v463 = vshrl.u32 %v462, 7
        %v464 = vsub.s32 2, %v463
        %v465 = vrot.slane %v437, %v464
        %v466 = vmul.f32 %v460, %v465
        %v467 = vadd.f32 %v457, %v466
        %468 = vset.pattern.permute.xlu0 3
        %469 = vperm.xlu0 %468, %v436
        %v470 = vpop.permute.xlu0 %469
        %v472 = vlaneseq
        %v473 = vshrl.u32 %v472, 7
        %v474 = vsub.s32 3, %v473
        %v475 = vrot.slane %v437, %v474
        %v476 = vmul.f32 %v470, %v475
        %v477 = vadd.f32 %v467, %v476
        %478 = vset.pattern.permute.xlu0 4
        %479 = vperm.xlu0 %478, %v436
        %v480 = vpop.permute.xlu0 %479
        %v482 = vlaneseq
        %v483 = vshrl.u32 %v482, 7
        %v484 = vsub.s32 4, %v483
        %v485 = vrot.slane %v437, %v484
        %v486 = vmul.f32 %v480, %v485
        %v487 = vadd.f32 %v477, %v486
        %488 = vset.pattern.permute.xlu0 5
        %489 = vperm.xlu0 %488, %v436
        %v490 = vpop.permute.xlu0 %489
        %v492 = vlaneseq
        %v493 = vshrl.u32 %v492, 7
        %v494 = vsub.s32 5, %v493
        %v495 = vrot.slane %v437, %v494
        %v496 = vmul.f32 %v490, %v495
        %v497 = vadd.f32 %v487, %v496
        %498 = vset.pattern.permute.xlu0 6
        %499 = vperm.xlu0 %498, %v436
        %v500 = vpop.permute.xlu0 %499
        %v502 = vlaneseq
        %v503 = vshrl.u32 %v502, 7
        %v504 = vsub.s32 6, %v503
        %v505 = vrot.slane %v437, %v504
        %v506 = vmul.f32 %v500, %v505
        %v507 = vadd.f32 %v497, %v506
        %508 = vset.pattern.permute.xlu0 7
        %509 = vperm.xlu0 %508, %v436
        %v510 = vpop.permute.xlu0 %509
        %v512 = vlaneseq
        %v513 = vshrl.u32 %v512, 7
        %v514 = vsub.s32 7, %v513
        %v515 = vrot.slane %v437, %v514
        %v516 = vmul.f32 %v510, %v515
        %v517 = vadd.f32 %v507, %v516
        %518 = vst [vmem:[%s305 + $0x8] sm:$0xff] %v517
        %s519 = sand.u32 %s177, 1
        %s520 = scalar_lea.sflag [#allocation4], %s519
        %s521 = sand.u32 %s177, 1
        %s522 = smul.addr %s521, 16
        %s523 = scalar_lea.vmem [#allocation5], %s522
        // Predicated region
        $region49: #{tpu_custom_call.1} parent=43 // pred_check
          %p524 = pneg %p187
        $region50: #{tpu_custom_call.1} parent=43 // pred_check_branch
          %526 = sbr.rel (%p524) target = $region52
        $region51: #{tpu_custom_call.1} parent=43 // pred_region
          %s528 = ssub.s32 256, 256
          %529 = vsyncadd %s520, %s528
          %s530 = smul.addr %s23, 2
          %s531 = smul.addr %s530, 128
          %s532 = scalar_lea.hbm %s6, %s531
          %s534 = sshll.u32 %s523, 4
          %s535 = int_to_ptr.vmem [resolvable:$true] %s534
          %537 = dma.vmem_to_hbm [thread:$0]  %s535, 256, %s532, %s520
        $region52: #{tpu_custom_call.1} parent=43 // pred_fallthru
          _
      $region44: #{tpu_custom_call.1} parent=5 // pred_fallthru
        _
      %p538 = scmp.le.s32.totalorder 2, %s18
      // Predicated region
      $region53: #{tpu_custom_call.1} parent=5 // pred_check
        %p539 = pneg %p538
      $region54: #{tpu_custom_call.1} parent=5 // pred_check_branch
        %541 = sbr.rel (%p539) target = $region56
      $region55: #{tpu_custom_call.1} parent=5 // pred_region
        %s542 = ssub.s32 %s18, 2
        // Predicated region
        $region57: #{tpu_custom_call.1} parent=55 // pred_check
          %p543 = pneg %p193
        $region58: #{tpu_custom_call.1} parent=55 // pred_check_branch
          %545 = sbr.rel (%p543) target = $region60
        $region59: #{tpu_custom_call.1} parent=55 // pred_region
          %s546 = sand.u32 %s178, 1
          %s547 = scalar_lea.sflag [#allocation4], %s546
          %s548 = sand.u32 %s178, 1
          %s549 = smul.addr %s548, 16
          %s550 = scalar_lea.vmem [#allocation5], %s549
          %551 = dma.done %s547, 256
        $region60: #{tpu_custom_call.1} parent=55 // pred_fallthru
          _
      $region56: #{tpu_custom_call.1} parent=5 // pred_fallthru
        _
    $region6: #{tpu_custom_call.1} parent=1 // loop_footer
      %s22 = sadd.s32 1, %s18
    $region7: #{tpu_custom_call.1} parent=1 // loop_footer_branch
      %17 = sbr.rel target = $region3
    $region8: #{tpu_custom_call.1} parent=1 // loop_exit
      _
    %552 = vsyncpa [#allocation3], 1
    %s553 = scalar_lea.sflag [#allocation3], 1
    %554 = vsyncpa %s553, 1
    %555 = vsyncpa [#allocation4], 1
    %s556 = scalar_lea.sflag [#allocation4], 1
    %557 = vsyncpa %s556, 1

</llo_original>
